<compile_context>
chip_gen: v5e
topology: v5e:2x2
jax: 0.10.0
libtpu: 0.0.40
codegen_flags: <defaults>
</compile_context>

<pallas_src>
import jax
import jax.numpy as jnp
from jax import lax
from jax.experimental import pallas as pl
from jax.experimental.pallas import tpu as pltpu

# ---- problem sizes (small, consistent with the module) ----
B = 2            # batch_size
F = 8            # nb_features
C = 8            # nb_channels
MP = 8           # max_points (power of two -> roll-and-max tree)
P = 128          # max_pillars
NY = 16          # canvas height
NX = 16          # canvas width
NW = NX // MP    # pooled width after MaxPool2d((1, max_points))
NYX = NY * NX    # 256
NYW = NY * NW    # 32
EPS = 1e-3       # BatchNorm eps
NPK = F + C + 6  # packed-parameter columns: [w1 | w2 | b1 g1 bt1 b2 g2 bt2]


# ---------------- fused kernel: MPN -> scatter -> encoder (one frame per grid step) ----------------
def pillarnet_kernel(x_ref, idx_ref, pk_ref, o_ref):
    # x_ref:  (B, F, MP*P) bf16  -- free view of NCHW (B, F, MP, P), flat index = m*P + p
    # idx_ref:(B, P) int32       -- y*NX + x per pillar, P on the lane axis
    # pk_ref: (C, NPK) f32       -- packed [w1 | w2 | b1 g1 bt1 b2 g2 bt2]
    # o_ref:  (B, C, NYW) f32
    pk = pk_ref[...]
    w1 = pk[:, 0:F]
    w2 = pk[:, F:F + C]
    b1 = pk[:, F + C + 0:F + C + 1]
    g1 = pk[:, F + C + 1:F + C + 2]
    bt1 = pk[:, F + C + 2:F + C + 3]
    b2 = pk[:, F + C + 3:F + C + 4]
    g2 = pk[:, F + C + 4:F + C + 5]
    bt2 = pk[:, F + C + 5:F + C + 6]
    w1b = w1.astype(jnp.bfloat16)
    w2b = w2.astype(jnp.bfloat16)
    idx_all = idx_ref[...]                                     # (B, P)

    # ---- pass 1: MiniPointNet conv, single-pass BN1 batch stats; conv result is NOT kept ----
    s1 = jnp.zeros((C, 1), jnp.float32)
    q1 = jnp.zeros((C, 1), jnp.float32)
    for b in range(B):
        zb = jnp.dot(w1b, x_ref[b], preferred_element_type=jnp.float32) + b1   # (C, MP*P)
        s1 = s1 + jnp.sum(zb, axis=1, keepdims=True)
        q1 = q1 + jnp.sum(zb * zb, axis=1, keepdims=True)
    n1 = float(B * MP * P)
    mean1 = s1 / n1
    var1 = jnp.maximum(q1 / n1 - mean1 * mean1, 0.0)
    a1 = g1 * lax.rsqrt(var1 + EPS)                            # fold BN1 into scale/shift
    c1 = bt1 - mean1 * a1

    # ---- pass 2: recompute conv, BN1+ReLU+point-max -> bf16 one-hot scatter -> encoder conv ----
    rows = lax.broadcasted_iota(jnp.int32, (NYX, P), 0)        # hoisted: built once, not per batch
    z2 = []
    s2 = jnp.zeros((C, 1), jnp.float32)
    q2 = jnp.zeros((C, 1), jnp.float32)
    for b in range(B):
        zb = jnp.dot(w1b, x_ref[b], preferred_element_type=jnp.float32) + b1   # recompute (MXU idle)
        yb = jnp.maximum(zb * a1 + c1, 0.0)                    # (C, MP*P)
        # MaxPool2d((MP,1)): max over points = max over MP lane-aligned 128-wide slabs
        vox = yb[:, 0:P]
        for mp_i in range(1, MP):
            vox = jnp.maximum(vox, yb[:, mp_i * P:(mp_i + 1) * P])              # (C, P)

        # scatter: bf16 one-hot (NYX, P), P on lanes; contract P on the MXU (sums duplicates)
        onehot = (rows == idx_all[b:b + 1, :]).astype(jnp.bfloat16)             # exact 0/1
        canvas = lax.dot_general(vox.astype(jnp.bfloat16), onehot,
                                 (((1,), (1,)), ((), ())),
                                 preferred_element_type=jnp.float32)            # (C, NYX)

        # encoder 1x1 conv (bf16 operands, f32 accumulate)
        zb2 = jnp.dot(w2b, canvas.astype(jnp.bfloat16),
                      preferred_element_type=jnp.float32) + b2                  # (C, NYX)
        z2.append(zb2)
        s2 = s2 + jnp.sum(zb2, axis=1, keepdims=True)
        q2 = q2 + jnp.sum(zb2 * zb2, axis=1, keepdims=True)

    n2 = float(B * NYX)
    mean2 = s2 / n2
    var2 = jnp.maximum(q2 / n2 - mean2 * mean2, 0.0)
    a2 = g2 * lax.rsqrt(var2 + EPS)
    c2 = bt2 - mean2 * a2

    # ---- pass 3: BN2 + ReLU + MaxPool2d((1, MP)) via roll-and-max tree + bf16 selector matmul ----
    # sel built here (not earlier) so it is never live across the scatter region; bf16 halves it.
    sel = (lax.broadcasted_iota(jnp.int32, (NYX, NYW), 0)
           == MP * lax.broadcasted_iota(jnp.int32, (NYX, NYW), 1)).astype(jnp.bfloat16)
    for b in range(B):
        yb2 = jnp.maximum(z2[b] * a2 + c2, 0.0)                # (C, NYX)
        m = yb2
        sh = 1
        while sh < MP:                                         # after loop: m[:, n] = max(y[n..n+MP-1])
            m = jnp.maximum(m, pltpu.roll(m, shift=NYX - sh, axis=1))
            sh *= 2
        pooled = jnp.dot(m.astype(jnp.bfloat16), sel,
                         preferred_element_type=jnp.float32)    # (C, NYW), picks n = MP*k
        o_ref[b] = pooled


# ---------------- wrappers ----------------
@jax.jit
def pillarnet_forward_frames(x_frames, coords_frames, params):
    """Process NF independent frames in one launch (one frame = one module forward per grid step).

    x_frames:      (NF, B, F, MP, P)  PyTorch NCHW per frame
    coords_frames: (NF, B*P, 4) int rows = (batch, z, y, x), grouped by batch (P rows per batch)
    """
    nf = x_frames.shape[0]
    w1, b1, g1, bt1, w2, b2, g2, bt2 = params
    # pack 8 tiny parameter arrays into one block -> 3 kernel inputs total (fewer DMA descriptors)
    pk = jnp.concatenate([w1, w2, b1, g1, bt1, b2, g2, bt2], axis=1).astype(jnp.float32)  # (C, NPK)

    # free view of NCHW -> (NF, B, F, MP*P); bf16 halves the only non-trivial HBM transfer
    x_flat = x_frames.reshape(nf, B, F, MP * P).astype(jnp.bfloat16)
    # idx = y*nx + x, P on the lane axis
    idx = (coords_frames[..., 2] * NX + coords_frames[..., 3]).astype(jnp.int32).reshape(nf, B, P)

    out = pl.pallas_call(
        pillarnet_kernel,
        out_shape=jax.ShapeDtypeStruct((nf, B, C, NYW), jnp.float32),
        grid=(nf,),
        in_specs=[
            pl.BlockSpec((None, B, F, MP * P), lambda f: (f, 0, 0, 0)),
            pl.BlockSpec((None, B, P), lambda f: (f, 0, 0)),
            pl.BlockSpec((C, NPK), lambda f: (0, 0)),
        ],
        out_specs=pl.BlockSpec((None, B, C, NYW), lambda f: (f, 0, 0, 0)),
        # frames are independent -> shard across TensorCores on v7x; harmless on v5e/v6e
        compiler_params=pltpu.CompilerParams(dimension_semantics=("parallel",)),
    )(x_flat, idx, pk)

    return out.reshape(nf, B, C, NY, NW)


def pillarnet_forward(x_nchw, coords, params):
    """Single-frame forward matching the module interface."""
    return pillarnet_forward_frames(x_nchw[None], coords[None], params)[0]


# ---------------- pure-JAX f32 reference (same semantics, one frame) ----------------
def reference_forward(x_nchw, coords, params):
    w1, b1, g1, bt1, w2, b2, g2, bt2 = params
    # MiniPointNet
    z = jnp.einsum('cf,bfmp->bcmp', w1, x_nchw) + b1.reshape(1, C, 1, 1)
    mean = jnp.mean(z, axis=(0, 2, 3), keepdims=True)
    var = jnp.mean((z - mean) ** 2, axis=(0, 2, 3), keepdims=True)
    z = (z - mean) * lax.rsqrt(var + EPS) * g1.reshape(1, C, 1, 1) + bt1.reshape(1, C, 1, 1)
    z = jnp.maximum(z, 0.0)
    vox = jnp.max(z, axis=2)                                   # (B, C, P)
    # Scatter
    idx = (coords[:, 2] * NX + coords[:, 3]).astype(jnp.int32).reshape(B, P)
    canvases = []
    for b in range(B):
        c0 = jnp.zeros((C, NYX), dtype=vox.dtype)
        canvases.append(c0.at[:, idx[b]].set(vox[b]))
    canvas = jnp.stack(canvases, axis=0)                       # (B, C, NYX)
    # Encoder
    z2 = jnp.einsum('cd,bdn->bcn', w2, canvas) + b2.reshape(1, C, 1)
    mean2 = jnp.mean(z2, axis=(0, 2), keepdims=True)
    var2 = jnp.mean((z2 - mean2) ** 2, axis=(0, 2), keepdims=True)
    z2 = (z2 - mean2) * lax.rsqrt(var2 + EPS) * g2.reshape(1, C, 1) + bt2.reshape(1, C, 1)
    z2 = jnp.maximum(z2, 0.0)
    return z2.reshape(B, C, NY, NW, MP).max(axis=-1)           # (B, C, NY, NW)


if __name__ == "__main__":
    NF = 4                                                     # frames amortize launch cost / fill 2 TCs
    key = jax.random.PRNGKey(0)
    k_x, k_params, k_coords = jax.random.split(key, 3)

    # inputs in PyTorch NCHW layout per frame: (batch, nb_features, max_points, max_pillars)
    x_frames = jax.random.normal(k_x, (NF, B, F, MP, P), dtype=jnp.float32)

    # deterministic parameters (1x1 conv weights as plain matrices; BN affine params)
    kp = jax.random.split(k_params, 8)
    w1 = 0.2 * jax.random.normal(kp[0], (C, F), jnp.float32)
    b1 = 0.1 * jax.random.normal(kp[1], (C, 1), jnp.float32)
    g1 = 1.0 + 0.1 * jax.random.normal(kp[2], (C, 1), jnp.float32)
    bt1 = 0.1 * jax.random.normal(kp[3], (C, 1), jnp.float32)
    w2 = 0.2 * jax.random.normal(kp[4], (C, C), jnp.float32)
    b2 = 0.1 * jax.random.normal(kp[5], (C, 1), jnp.float32)
    g2 = 1.0 + 0.1 * jax.random.normal(kp[6], (C, 1), jnp.float32)
    bt2 = 0.1 * jax.random.normal(kp[7], (C, 1), jnp.float32)
    params = (w1, b1, g1, bt1, w2, b2, g2, bt2)

    # coords per frame: (B*P, 4) rows = (batch, z, y, x); grouped by batch, unique cells per batch
    kc = jax.random.split(k_coords, NF * B)
    frames_coords = []
    for f in range(NF):
        rows = []
        for b in range(B):
            perm = jax.random.permutation(kc[f * B + b], NYX)[:P]
            yy = (perm // NX).astype(jnp.int32)
            xx = (perm % NX).astype(jnp.int32)
            rows.append(jnp.stack([jnp.full((P,), b, jnp.int32),
                                   jnp.zeros((P,), jnp.int32), yy, xx], axis=1))
        frames_coords.append(jnp.concatenate(rows, axis=0))
    coords_frames = jnp.stack(frames_coords, axis=0)           # (NF, B*P, 4)

    out = jax.block_until_ready(pillarnet_forward_frames(x_frames, coords_frames, params))
    ref = jnp.stack([reference_forward(x_frames[f], coords_frames[f], params) for f in range(NF)])

    assert out.shape == (NF, B, C, NY, NW), out.shape
    max_err = float(jnp.max(jnp.abs(out - ref)))
    # bf16 matmul operands (with f32 accumulation) vs pure-f32 reference -> relaxed tolerance
    if max_err < 1e-1:
        print("KERNEL_OK")
    else:
        print(f"MISMATCH max_err={max_err}")
</pallas_src>

<mosaic_0001>
module attributes {stable_mosaic.version = 11 : i64} {
  func.func @pillarnet_kernel(%arg0: i32, %arg1: memref<1x2x8x1024xbf16, #tpu.memory_space<vmem>>, %arg2: memref<1x2x128xi32, #tpu.memory_space<vmem>>, %arg3: memref<8x22xf32, #tpu.memory_space<vmem>>, %arg4: memref<1x2x8x32xf32, #tpu.memory_space<vmem>>) attributes {dimension_semantics = [#tpu.dimension_semantics<parallel>], iteration_bounds = array<i64: 4>, scalar_prefetch = 0 : i64, scratch_operands = 0 : i64, tpu.core_type = #tpu.core_type<tc>, window_params = [{transform_indices = @transform_0, window_bounds = array<i64: 1, 2, 8, 1024>}, {transform_indices = @transform_1, window_bounds = array<i64: 1, 2, 128>}, {pipeline_mode = #tpu.pipeline_mode<synchronous>, transform_indices = @transform_2, window_bounds = array<i64: 8, 22>}, {transform_indices = @transform_3, window_bounds = array<i64: 1, 2, 8, 32>}]} {
    %c0 = arith.constant 0 : index
    %c0_0 = arith.constant 0 : index
    %0 = vector.load %arg3[%c0, %c0_0] : memref<8x22xf32, #tpu.memory_space<vmem>>, vector<8x22xf32>
    %1 = vector.extract_strided_slice %0 {offsets = [0, 0], sizes = [8, 8], strides = [1, 1]} : vector<8x22xf32> to vector<8x8xf32>
    %2 = vector.extract_strided_slice %0 {offsets = [0, 8], sizes = [8, 8], strides = [1, 1]} : vector<8x22xf32> to vector<8x8xf32>
    %3 = vector.extract_strided_slice %0 {offsets = [0, 16], sizes = [8, 1], strides = [1, 1]} : vector<8x22xf32> to vector<8x1xf32>
    %4 = vector.extract_strided_slice %0 {offsets = [0, 17], sizes = [8, 1], strides = [1, 1]} : vector<8x22xf32> to vector<8x1xf32>
    %5 = vector.extract_strided_slice %0 {offsets = [0, 18], sizes = [8, 1], strides = [1, 1]} : vector<8x22xf32> to vector<8x1xf32>
    %6 = vector.extract_strided_slice %0 {offsets = [0, 19], sizes = [8, 1], strides = [1, 1]} : vector<8x22xf32> to vector<8x1xf32>
    %7 = vector.extract_strided_slice %0 {offsets = [0, 20], sizes = [8, 1], strides = [1, 1]} : vector<8x22xf32> to vector<8x1xf32>
    %8 = vector.extract_strided_slice %0 {offsets = [0, 21], sizes = [8, 1], strides = [1, 1]} : vector<8x22xf32> to vector<8x1xf32>
    %9 = arith.truncf %1 : vector<8x8xf32> to vector<8x8xbf16>
    %10 = arith.truncf %2 : vector<8x8xf32> to vector<8x8xbf16>
    %c0_1 = arith.constant 0 : index
    %c0_2 = arith.constant 0 : index
    %c0_3 = arith.constant 0 : index
    %11 = vector.load %arg2[%c0_1, %c0_2, %c0_3] : memref<1x2x128xi32, #tpu.memory_space<vmem>>, vector<1x2x128xi32>
    %12 = vector.shape_cast %11 : vector<1x2x128xi32> to vector<2x128xi32>
    %cst = arith.constant 0.000000e+00 : f32
    %13 = vector.broadcast %cst : f32 to vector<8x1xf32>
    %cst_4 = arith.constant 0.000000e+00 : f32
    %14 = vector.broadcast %cst_4 : f32 to vector<8x1xf32>
    %c0_5 = arith.constant 0 : index
    %c0_6 = arith.constant 0 : index
    %c0_7 = arith.constant 0 : index
    %c0_8 = arith.constant 0 : index
    %15 = vector.load %arg1[%c0_5, %c0_6, %c0_7, %c0_8] : memref<1x2x8x1024xbf16, #tpu.memory_space<vmem>>, vector<1x1x8x1024xbf16>
    %16 = vector.shape_cast %15 : vector<1x1x8x1024xbf16> to vector<8x1024xbf16>
    %cst_9 = arith.constant dense<0.000000e+00> : vector<8x1024xf32>
    %17 = tpu.matmul %9, %16, %cst_9 {dimension_numbers = #tpu.dot_dimension_numbers<[1], [0], [0], [1], [0, 0, 1, 1], [], []>} : vector<8x8xbf16>, vector<8x1024xbf16>, vector<8x1024xf32> -> vector<8x1024xf32>
    %18 = vector.broadcast %3 : vector<8x1xf32> to vector<8x1024xf32>
    %19 = arith.addf %17, %18 : vector<8x1024xf32>
    %cst_10 = arith.constant dense<0.000000e+00> : vector<8xf32>
    %20 = vector.multi_reduction <add>, %19, %cst_10 [1] : vector<8x1024xf32> to vector<8xf32>
    %21 = vector.shape_cast %20 : vector<8xf32> to vector<8x1xf32>
    %22 = arith.addf %13, %21 : vector<8x1xf32>
    %23 = arith.mulf %19, %19 : vector<8x1024xf32>
    %cst_11 = arith.constant dense<0.000000e+00> : vector<8xf32>
    %24 = vector.multi_reduction <add>, %23, %cst_11 [1] : vector<8x1024xf32> to vector<8xf32>
    %25 = vector.shape_cast %24 : vector<8xf32> to vector<8x1xf32>
    %26 = arith.addf %14, %25 : vector<8x1xf32>
    %c0_12 = arith.constant 0 : index
    %c1 = arith.constant 1 : index
    %c0_13 = arith.constant 0 : index
    %c0_14 = arith.constant 0 : index
    %27 = vector.load %arg1[%c0_12, %c1, %c0_13, %c0_14] : memref<1x2x8x1024xbf16, #tpu.memory_space<vmem>>, vector<1x1x8x1024xbf16>
    %28 = vector.shape_cast %27 : vector<1x1x8x1024xbf16> to vector<8x1024xbf16>
    %cst_15 = arith.constant dense<0.000000e+00> : vector<8x1024xf32>
    %29 = tpu.matmul %9, %28, %cst_15 {dimension_numbers = #tpu.dot_dimension_numbers<[1], [0], [0], [1], [0, 0, 1, 1], [], []>} : vector<8x8xbf16>, vector<8x1024xbf16>, vector<8x1024xf32> -> vector<8x1024xf32>
    %30 = vector.broadcast %3 : vector<8x1xf32> to vector<8x1024xf32>
    %31 = arith.addf %29, %30 : vector<8x1024xf32>
    %cst_16 = arith.constant dense<0.000000e+00> : vector<8xf32>
    %32 = vector.multi_reduction <add>, %31, %cst_16 [1] : vector<8x1024xf32> to vector<8xf32>
    %33 = vector.shape_cast %32 : vector<8xf32> to vector<8x1xf32>
    %34 = arith.addf %22, %33 : vector<8x1xf32>
    %35 = arith.mulf %31, %31 : vector<8x1024xf32>
    %cst_17 = arith.constant dense<0.000000e+00> : vector<8xf32>
    %36 = vector.multi_reduction <add>, %35, %cst_17 [1] : vector<8x1024xf32> to vector<8xf32>
    %37 = vector.shape_cast %36 : vector<8xf32> to vector<8x1xf32>
    %38 = arith.addf %26, %37 : vector<8x1xf32>
    %cst_18 = arith.constant 2.048000e+03 : f32
    %39 = vector.broadcast %cst_18 : f32 to vector<8x1xf32>
    %40 = arith.divf %34, %39 : vector<8x1xf32>
    %cst_19 = arith.constant 2.048000e+03 : f32
    %41 = vector.broadcast %cst_19 : f32 to vector<8x1xf32>
    %42 = arith.divf %38, %41 : vector<8x1xf32>
    %43 = arith.mulf %40, %40 : vector<8x1xf32>
    %44 = arith.subf %42, %43 : vector<8x1xf32>
    %cst_20 = arith.constant 0.000000e+00 : f32
    %45 = vector.broadcast %cst_20 : f32 to vector<8x1xf32>
    %46 = arith.maximumf %44, %45 : vector<8x1xf32>
    %cst_21 = arith.constant 1.000000e-03 : f32
    %47 = vector.broadcast %cst_21 : f32 to vector<8x1xf32>
    %48 = arith.addf %46, %47 : vector<8x1xf32>
    %49 = math.rsqrt %48 : vector<8x1xf32>
    %50 = arith.mulf %4, %49 : vector<8x1xf32>
    %51 = arith.mulf %40, %50 : vector<8x1xf32>
    %52 = arith.subf %5, %51 : vector<8x1xf32>
    %53 = tpu.iota {dimensions = array<i32: 0>} : vector<256x128xi32>
    %cst_22 = arith.constant 0.000000e+00 : f32
    %54 = vector.broadcast %cst_22 : f32 to vector<8x1xf32>
    %cst_23 = arith.constant 0.000000e+00 : f32
    %55 = vector.broadcast %cst_23 : f32 to vector<8x1xf32>
    %c0_24 = arith.constant 0 : index
    %c0_25 = arith.constant 0 : index
    %c0_26 = arith.constant 0 : index
    %c0_27 = arith.constant 0 : index
    %56 = vector.load %arg1[%c0_24, %c0_25, %c0_26, %c0_27] : memref<1x2x8x1024xbf16, #tpu.memory_space<vmem>>, vector<1x1x8x1024xbf16>
    %57 = vector.shape_cast %56 : vector<1x1x8x1024xbf16> to vector<8x1024xbf16>
    %cst_28 = arith.constant dense<0.000000e+00> : vector<8x1024xf32>
    %58 = tpu.matmul %9, %57, %cst_28 {dimension_numbers = #tpu.dot_dimension_numbers<[1], [0], [0], [1], [0, 0, 1, 1], [], []>} : vector<8x8xbf16>, vector<8x1024xbf16>, vector<8x1024xf32> -> vector<8x1024xf32>
    %59 = vector.broadcast %3 : vector<8x1xf32> to vector<8x1024xf32>
    %60 = arith.addf %58, %59 : vector<8x1024xf32>
    %61 = vector.broadcast %50 : vector<8x1xf32> to vector<8x1024xf32>
    %62 = arith.mulf %60, %61 : vector<8x1024xf32>
    %63 = vector.broadcast %52 : vector<8x1xf32> to vector<8x1024xf32>
    %64 = arith.addf %62, %63 : vector<8x1024xf32>
    %cst_29 = arith.constant 0.000000e+00 : f32
    %65 = vector.broadcast %cst_29 : f32 to vector<8x1024xf32>
    %66 = arith.maximumf %64, %65 : vector<8x1024xf32>
    %67 = vector.extract_strided_slice %66 {offsets = [0, 0], sizes = [8, 128], strides = [1, 1]} : vector<8x1024xf32> to vector<8x128xf32>
    %68 = vector.extract_strided_slice %66 {offsets = [0, 128], sizes = [8, 128], strides = [1, 1]} : vector<8x1024xf32> to vector<8x128xf32>
    %69 = arith.maximumf %67, %68 : vector<8x128xf32>
    %70 = vector.extract_strided_slice %66 {offsets = [0, 256], sizes = [8, 128], strides = [1, 1]} : vector<8x1024xf32> to vector<8x128xf32>
    %71 = arith.maximumf %69, %70 : vector<8x128xf32>
    %72 = vector.extract_strided_slice %66 {offsets = [0, 384], sizes = [8, 128], strides = [1, 1]} : vector<8x1024xf32> to vector<8x128xf32>
    %73 = arith.maximumf %71, %72 : vector<8x128xf32>
    %74 = vector.extract_strided_slice %66 {offsets = [0, 512], sizes = [8, 128], strides = [1, 1]} : vector<8x1024xf32> to vector<8x128xf32>
    %75 = arith.maximumf %73, %74 : vector<8x128xf32>
    %76 = vector.extract_strided_slice %66 {offsets = [0, 640], sizes = [8, 128], strides = [1, 1]} : vector<8x1024xf32> to vector<8x128xf32>
    %77 = arith.maximumf %75, %76 : vector<8x128xf32>
    %78 = vector.extract_strided_slice %66 {offsets = [0, 768], sizes = [8, 128], strides = [1, 1]} : vector<8x1024xf32> to vector<8x128xf32>
    %79 = arith.maximumf %77, %78 : vector<8x128xf32>
    %80 = vector.extract_strided_slice %66 {offsets = [0, 896], sizes = [8, 128], strides = [1, 1]} : vector<8x1024xf32> to vector<8x128xf32>
    %81 = arith.maximumf %79, %80 : vector<8x128xf32>
    %82 = vector.extract_strided_slice %12 {offsets = [0, 0], sizes = [1, 128], strides = [1, 1]} : vector<2x128xi32> to vector<1x128xi32>
    %83 = vector.broadcast %82 : vector<1x128xi32> to vector<256x128xi32>
    %84 = arith.cmpi eq, %53, %83 : vector<256x128xi32>
    %85 = arith.extui %84 : vector<256x128xi1> to vector<256x128xi32>
    %86 = arith.sitofp %85 : vector<256x128xi32> to vector<256x128xf32>
    %87 = arith.truncf %86 : vector<256x128xf32> to vector<256x128xbf16>
    %88 = arith.truncf %81 : vector<8x128xf32> to vector<8x128xbf16>
    %cst_30 = arith.constant dense<0.000000e+00> : vector<8x256xf32>
    %89 = tpu.matmul %88, %87, %cst_30 {dimension_numbers = #tpu.dot_dimension_numbers<[1], [1], [0], [0], [0, 0, 1, 0], [], []>} : vector<8x128xbf16>, vector<256x128xbf16>, vector<8x256xf32> -> vector<8x256xf32>
    %90 = arith.truncf %89 : vector<8x256xf32> to vector<8x256xbf16>
    %cst_31 = arith.constant dense<0.000000e+00> : vector<8x256xf32>
    %91 = tpu.matmul %10, %90, %cst_31 {dimension_numbers = #tpu.dot_dimension_numbers<[1], [0], [0], [1], [0, 0, 1, 1], [], []>} : vector<8x8xbf16>, vector<8x256xbf16>, vector<8x256xf32> -> vector<8x256xf32>
    %92 = vector.broadcast %6 : vector<8x1xf32> to vector<8x256xf32>
    %93 = arith.addf %91, %92 : vector<8x256xf32>
    %cst_32 = arith.constant dense<0.000000e+00> : vector<8xf32>
    %94 = vector.multi_reduction <add>, %93, %cst_32 [1] : vector<8x256xf32> to vector<8xf32>
    %95 = vector.shape_cast %94 : vector<8xf32> to vector<8x1xf32>
    %96 = arith.addf %54, %95 : vector<8x1xf32>
    %97 = arith.mulf %93, %93 : vector<8x256xf32>
    %cst_33 = arith.constant dense<0.000000e+00> : vector<8xf32>
    %98 = vector.multi_reduction <add>, %97, %cst_33 [1] : vector<8x256xf32> to vector<8xf32>
    %99 = vector.shape_cast %98 : vector<8xf32> to vector<8x1xf32>
    %100 = arith.addf %55, %99 : vector<8x1xf32>
    %c0_34 = arith.constant 0 : index
    %c1_35 = arith.constant 1 : index
    %c0_36 = arith.constant 0 : index
    %c0_37 = arith.constant 0 : index
    %101 = vector.load %arg1[%c0_34, %c1_35, %c0_36, %c0_37] : memref<1x2x8x1024xbf16, #tpu.memory_space<vmem>>, vector<1x1x8x1024xbf16>
    %102 = vector.shape_cast %101 : vector<1x1x8x1024xbf16> to vector<8x1024xbf16>
    %cst_38 = arith.constant dense<0.000000e+00> : vector<8x1024xf32>
    %103 = tpu.matmul %9, %102, %cst_38 {dimension_numbers = #tpu.dot_dimension_numbers<[1], [0], [0], [1], [0, 0, 1, 1], [], []>} : vector<8x8xbf16>, vector<8x1024xbf16>, vector<8x1024xf32> -> vector<8x1024xf32>
    %104 = vector.broadcast %3 : vector<8x1xf32> to vector<8x1024xf32>
    %105 = arith.addf %103, %104 : vector<8x1024xf32>
    %106 = vector.broadcast %50 : vector<8x1xf32> to vector<8x1024xf32>
    %107 = arith.mulf %105, %106 : vector<8x1024xf32>
    %108 = vector.broadcast %52 : vector<8x1xf32> to vector<8x1024xf32>
    %109 = arith.addf %107, %108 : vector<8x1024xf32>
    %cst_39 = arith.constant 0.000000e+00 : f32
    %110 = vector.broadcast %cst_39 : f32 to vector<8x1024xf32>
    %111 = arith.maximumf %109, %110 : vector<8x1024xf32>
    %112 = vector.extract_strided_slice %111 {offsets = [0, 0], sizes = [8, 128], strides = [1, 1]} : vector<8x1024xf32> to vector<8x128xf32>
    %113 = vector.extract_strided_slice %111 {offsets = [0, 128], sizes = [8, 128], strides = [1, 1]} : vector<8x1024xf32> to vector<8x128xf32>
    %114 = arith.maximumf %112, %113 : vector<8x128xf32>
    %115 = vector.extract_strided_slice %111 {offsets = [0, 256], sizes = [8, 128], strides = [1, 1]} : vector<8x1024xf32> to vector<8x128xf32>
    %116 = arith.maximumf %114, %115 : vector<8x128xf32>
    %117 = vector.extract_strided_slice %111 {offsets = [0, 384], sizes = [8, 128], strides = [1, 1]} : vector<8x1024xf32> to vector<8x128xf32>
    %118 = arith.maximumf %116, %117 : vector<8x128xf32>
    %119 = vector.extract_strided_slice %111 {offsets = [0, 512], sizes = [8, 128], strides = [1, 1]} : vector<8x1024xf32> to vector<8x128xf32>
    %120 = arith.maximumf %118, %119 : vector<8x128xf32>
    %121 = vector.extract_strided_slice %111 {offsets = [0, 640], sizes = [8, 128], strides = [1, 1]} : vector<8x1024xf32> to vector<8x128xf32>
    %122 = arith.maximumf %120, %121 : vector<8x128xf32>
    %123 = vector.extract_strided_slice %111 {offsets = [0, 768], sizes = [8, 128], strides = [1, 1]} : vector<8x1024xf32> to vector<8x128xf32>
    %124 = arith.maximumf %122, %123 : vector<8x128xf32>
    %125 = vector.extract_strided_slice %111 {offsets = [0, 896], sizes = [8, 128], strides = [1, 1]} : vector<8x1024xf32> to vector<8x128xf32>
    %126 = arith.maximumf %124, %125 : vector<8x128xf32>
    %127 = vector.extract_strided_slice %12 {offsets = [1, 0], sizes = [1, 128], strides = [1, 1]} : vector<2x128xi32> to vector<1x128xi32>
    %128 = vector.broadcast %127 : vector<1x128xi32> to vector<256x128xi32>
    %129 = arith.cmpi eq, %53, %128 : vector<256x128xi32>
    %130 = arith.extui %129 : vector<256x128xi1> to vector<256x128xi32>
    %131 = arith.sitofp %130 : vector<256x128xi32> to vector<256x128xf32>
    %132 = arith.truncf %131 : vector<256x128xf32> to vector<256x128xbf16>
    %133 = arith.truncf %126 : vector<8x128xf32> to vector<8x128xbf16>
    %cst_40 = arith.constant dense<0.000000e+00> : vector<8x256xf32>
    %134 = tpu.matmul %133, %132, %cst_40 {dimension_numbers = #tpu.dot_dimension_numbers<[1], [1], [0], [0], [0, 0, 1, 0], [], []>} : vector<8x128xbf16>, vector<256x128xbf16>, vector<8x256xf32> -> vector<8x256xf32>
    %135 = arith.truncf %134 : vector<8x256xf32> to vector<8x256xbf16>
    %cst_41 = arith.constant dense<0.000000e+00> : vector<8x256xf32>
    %136 = tpu.matmul %10, %135, %cst_41 {dimension_numbers = #tpu.dot_dimension_numbers<[1], [0], [0], [1], [0, 0, 1, 1], [], []>} : vector<8x8xbf16>, vector<8x256xbf16>, vector<8x256xf32> -> vector<8x256xf32>
    %137 = vector.broadcast %6 : vector<8x1xf32> to vector<8x256xf32>
    %138 = arith.addf %136, %137 : vector<8x256xf32>
    %cst_42 = arith.constant dense<0.000000e+00> : vector<8xf32>
    %139 = vector.multi_reduction <add>, %138, %cst_42 [1] : vector<8x256xf32> to vector<8xf32>
    %140 = vector.shape_cast %139 : vector<8xf32> to vector<8x1xf32>
    %141 = arith.addf %96, %140 : vector<8x1xf32>
    %142 = arith.mulf %138, %138 : vector<8x256xf32>
    %cst_43 = arith.constant dense<0.000000e+00> : vector<8xf32>
    %143 = vector.multi_reduction <add>, %142, %cst_43 [1] : vector<8x256xf32> to vector<8xf32>
    %144 = vector.shape_cast %143 : vector<8xf32> to vector<8x1xf32>
    %145 = arith.addf %100, %144 : vector<8x1xf32>
    %cst_44 = arith.constant 5.120000e+02 : f32
    %146 = vector.broadcast %cst_44 : f32 to vector<8x1xf32>
    %147 = arith.divf %141, %146 : vector<8x1xf32>
    %cst_45 = arith.constant 5.120000e+02 : f32
    %148 = vector.broadcast %cst_45 : f32 to vector<8x1xf32>
    %149 = arith.divf %145, %148 : vector<8x1xf32>
    %150 = arith.mulf %147, %147 : vector<8x1xf32>
    %151 = arith.subf %149, %150 : vector<8x1xf32>
    %cst_46 = arith.constant 0.000000e+00 : f32
    %152 = vector.broadcast %cst_46 : f32 to vector<8x1xf32>
    %153 = arith.maximumf %151, %152 : vector<8x1xf32>
    %cst_47 = arith.constant 1.000000e-03 : f32
    %154 = vector.broadcast %cst_47 : f32 to vector<8x1xf32>
    %155 = arith.addf %153, %154 : vector<8x1xf32>
    %156 = math.rsqrt %155 : vector<8x1xf32>
    %157 = arith.mulf %7, %156 : vector<8x1xf32>
    %158 = arith.mulf %147, %157 : vector<8x1xf32>
    %159 = arith.subf %8, %158 : vector<8x1xf32>
    %160 = tpu.iota {dimensions = array<i32: 0>} : vector<256x32xi32>
    %161 = tpu.iota {dimensions = array<i32: 1>} : vector<256x32xi32>
    %c8_i32 = arith.constant 8 : i32
    %162 = vector.broadcast %c8_i32 : i32 to vector<256x32xi32>
    %163 = arith.muli %162, %161 : vector<256x32xi32>
    %164 = arith.cmpi eq, %160, %163 : vector<256x32xi32>
    %165 = arith.extui %164 : vector<256x32xi1> to vector<256x32xi32>
    %166 = arith.sitofp %165 : vector<256x32xi32> to vector<256x32xf32>
    %167 = arith.truncf %166 : vector<256x32xf32> to vector<256x32xbf16>
    %168 = vector.broadcast %157 : vector<8x1xf32> to vector<8x256xf32>
    %169 = arith.mulf %93, %168 : vector<8x256xf32>
    %170 = vector.broadcast %159 : vector<8x1xf32> to vector<8x256xf32>
    %171 = arith.addf %169, %170 : vector<8x256xf32>
    %cst_48 = arith.constant 0.000000e+00 : f32
    %172 = vector.broadcast %cst_48 : f32 to vector<8x256xf32>
    %173 = arith.maximumf %171, %172 : vector<8x256xf32>
    %c255_i32 = arith.constant 255 : i32
    %174 = tpu.dynamic_rotate %173 by %c255_i32 dim 1 : vector<8x256xf32>, i32 -> vector<8x256xf32>
    %175 = arith.maximumf %173, %174 : vector<8x256xf32>
    %c254_i32 = arith.constant 254 : i32
    %176 = tpu.dynamic_rotate %175 by %c254_i32 dim 1 : vector<8x256xf32>, i32 -> vector<8x256xf32>
    %177 = arith.maximumf %175, %176 : vector<8x256xf32>
    %c252_i32 = arith.constant 252 : i32
    %178 = tpu.dynamic_rotate %177 by %c252_i32 dim 1 : vector<8x256xf32>, i32 -> vector<8x256xf32>
    %179 = arith.maximumf %177, %178 : vector<8x256xf32>
    %180 = arith.truncf %179 : vector<8x256xf32> to vector<8x256xbf16>
    %cst_49 = arith.constant dense<0.000000e+00> : vector<8x32xf32>
    %181 = tpu.matmul %180, %167, %cst_49 {dimension_numbers = #tpu.dot_dimension_numbers<[1], [0], [0], [1], [0, 0, 1, 1], [], []>} : vector<8x256xbf16>, vector<256x32xbf16>, vector<8x32xf32> -> vector<8x32xf32>
    %c0_50 = arith.constant 0 : index
    %c0_51 = arith.constant 0 : index
    %c0_52 = arith.constant 0 : index
    %c0_53 = arith.constant 0 : index
    %182 = vector.load %arg4[%c0_50, %c0_51, %c0_52, %c0_53] : memref<1x2x8x32xf32, #tpu.memory_space<vmem>>, vector<1x1x8x32xf32>
    %183 = vector.shape_cast %182 : vector<1x1x8x32xf32> to vector<8x32xf32>
    %184 = vector.shape_cast %181 : vector<8x32xf32> to vector<1x1x8x32xf32>
    tpu.vector_store %arg4[%c0_50, %c0_51, %c0_52, %c0_53], %184 {strides = array<i32>} : memref<1x2x8x32xf32, #tpu.memory_space<vmem>>, vector<1x1x8x32xf32>,
    %185 = vector.broadcast %157 : vector<8x1xf32> to vector<8x256xf32>
    %186 = arith.mulf %138, %185 : vector<8x256xf32>
    %187 = vector.broadcast %159 : vector<8x1xf32> to vector<8x256xf32>
    %188 = arith.addf %186, %187 : vector<8x256xf32>
    %cst_54 = arith.constant 0.000000e+00 : f32
    %189 = vector.broadcast %cst_54 : f32 to vector<8x256xf32>
    %190 = arith.maximumf %188, %189 : vector<8x256xf32>
    %c255_i32_55 = arith.constant 255 : i32
    %191 = tpu.dynamic_rotate %190 by %c255_i32_55 dim 1 : vector<8x256xf32>, i32 -> vector<8x256xf32>
    %192 = arith.maximumf %190, %191 : vector<8x256xf32>
    %c254_i32_56 = arith.constant 254 : i32
    %193 = tpu.dynamic_rotate %192 by %c254_i32_56 dim 1 : vector<8x256xf32>, i32 -> vector<8x256xf32>
    %194 = arith.maximumf %192, %193 : vector<8x256xf32>
    %c252_i32_57 = arith.constant 252 : i32
    %195 = tpu.dynamic_rotate %194 by %c252_i32_57 dim 1 : vector<8x256xf32>, i32 -> vector<8x256xf32>
    %196 = arith.maximumf %194, %195 : vector<8x256xf32>
    %197 = arith.truncf %196 : vector<8x256xf32> to vector<8x256xbf16>
    %cst_58 = arith.constant dense<0.000000e+00> : vector<8x32xf32>
    %198 = tpu.matmul %197, %167, %cst_58 {dimension_numbers = #tpu.dot_dimension_numbers<[1], [0], [0], [1], [0, 0, 1, 1], [], []>} : vector<8x256xbf16>, vector<256x32xbf16>, vector<8x32xf32> -> vector<8x32xf32>
    %c0_59 = arith.constant 0 : index
    %c1_60 = arith.constant 1 : index
    %c0_61 = arith.constant 0 : index
    %c0_62 = arith.constant 0 : index
    %199 = vector.load %arg4[%c0_59, %c1_60, %c0_61, %c0_62] : memref<1x2x8x32xf32, #tpu.memory_space<vmem>>, vector<1x1x8x32xf32>
    %200 = vector.shape_cast %199 : vector<1x1x8x32xf32> to vector<8x32xf32>
    %201 = vector.shape_cast %198 : vector<8x32xf32> to vector<1x1x8x32xf32>
    tpu.vector_store %arg4[%c0_59, %c1_60, %c0_61, %c0_62], %201 {strides = array<i32>} : memref<1x2x8x32xf32, #tpu.memory_space<vmem>>, vector<1x1x8x32xf32>,
    return
  }
  func.func @transform_0(%arg0: i32) -> (i32, i32, i32, i32) {
    %c0_i32 = arith.constant 0 : i32
    %c0_i32_0 = arith.constant 0 : i32
    %c0_i32_1 = arith.constant 0 : i32
    %c0_i32_2 = arith.constant 0 : i32
    return %arg0, %c0_i32, %c0_i32_0, %c0_i32_1 : i32, i32, i32, i32
  }
  func.func @transform_1(%arg0: i32) -> (i32, i32, i32) {
    %c0_i32 = arith.constant 0 : i32
    %c0_i32_0 = arith.constant 0 : i32
    %c0_i32_1 = arith.constant 0 : i32
    return %arg0, %c0_i32, %c0_i32_0 : i32, i32, i32
  }
  func.func @transform_2(%arg0: i32) -> (i32, i32) {
    %c0_i32 = arith.constant 0 : i32
    %c0_i32_0 = arith.constant 0 : i32
    %c0_i32_1 = arith.constant 0 : i32
    return %c0_i32, %c0_i32_0 : i32, i32
  }
  func.func @transform_3(%arg0: i32) -> (i32, i32, i32, i32) {
    %c0_i32 = arith.constant 0 : i32
    %c0_i32_0 = arith.constant 0 : i32
    %c0_i32_1 = arith.constant 0 : i32
    %c0_i32_2 = arith.constant 0 : i32
    return %arg0, %c0_i32, %c0_i32_0, %c0_i32_1 : i32, i32, i32, i32
  }
}

</mosaic_0001>

<llo_original>
// kernel: pillarnet_forward_frames.1
$region0: #{pillarnet_forward_frames.1}
  #allocation0 [shape = 'u32[]', space=smem, size = 0x4, offset = 0x4, fixed_abs, tag = 'smem constant byte address 0x4 - core index']
  #allocation1 [shape = 'u32[72,128]{1,0:T(1,128)}', space=vmem, size = 0x9000, scoped, tag = 'internal scratch']
  %s0 = inlined_call_operand.vmem [shape: bf16[4,2,8,1024], index: 0, kind: input, shape index: {}]
  %s1 = inlined_call_operand.vmem [shape: s32[4,2,128], index: 1, kind: input, shape index: {}]
  %s2 = inlined_call_operand.vmem [shape: f32[8,22], index: 2, kind: input, shape index: {}]
  %s3 = inlined_call_operand.vmem [shape: f32[4,2,8,32], index: 3, kind: output, shape index: {}]
  %s4 = sld [smem:[#allocation0]]
  $region45: #{pillarnet_forward_frames.1} parent=0
    _
  %s6 = ssub.s32 1, %s4
  %s7 = scalar_select 0, %s6, %s4
  loop: start=0, step=1, limit=6
  $region2: #{pillarnet_forward_frames.1} parent=0 // loop_pre_header
    _
  $region3: #{pillarnet_forward_frames.1} parent=0 // loop_header
    %s9 = sphi 0, %s13
    %p10 = scmp.ge.s32.totalorder %s9, 6
    %s19 = sphi 0, %s21
    %s22 = sphi 0, %s19
    %s23 = sphi 0, %s22
    %s39 = sphi 0, %s23
    %s45 = sphi 0, %s47
    %s48 = sphi 0, %s45
    %s49 = sphi 0, %s48
    %s65 = sphi 0, %s49
    %s69 = sphi 0, %s69
    %s71 = sphi 0, %s69
    %s72 = sphi 0, %s71
    %s86 = sphi 0, %s72
    %s92 = sphi 0, %s94
    %s95 = sphi 0, %s92
    %s96 = sphi 0, %s95
    %s112 = sphi 0, %s96
  $region4: #{pillarnet_forward_frames.1} parent=0 // loop_header_branch
    %12 = sbr.rel (%p10) target = $region8
  $region5: #{pillarnet_forward_frames.1} parent=0 // loop_body
    %s14 = ssub.s32 %s9, 1
    %s15 = ssub.s32 %s9, 2
    %s16 = sadd.s32 %s9, 1
    %s17 = ssub.s32 %s9, %s16
    %p18 = scmp.eq.s32.totalorder %s17, 0
    %s20 = sadd.s32 %s19, 1
    %s21 = scalar_select %p18, %s19, %s20
    %p24 = pneg %p18
    %p25 = scmp.eq.s32.totalorder %s9, 3
    %p26 = por %p24, %p25
    %p27 = scmp.ne.s32.totalorder %s19, %s22
    %p28 = scmp.eq.s32.totalorder %s9, 0
    %p29 = por %p27, %p28
    %p30 = scmp.ne.s32.totalorder %s19, %s22
    %p31 = scmp.eq.s32.totalorder %s14, 3
    %p32 = por %p30, %p31
    %p33 = scmp.ne.s32.totalorder %s22, %s23
    %p34 = scmp.eq.s32.totalorder %s14, 0
    %p35 = por %p33, %p34
    %p36 = scmp.ne.s32.totalorder %s22, %s23
    %p37 = scmp.eq.s32.totalorder %s15, 3
    %p38 = por %p36, %p37
    %p40 = scmp.ne.s32.totalorder %s23, %s39
    %p41 = scmp.eq.s32.totalorder %s15, 0
    %p42 = por %p40, %p41
    %s43 = ssub.s32 %s9, %s16
    %p44 = scmp.eq.s32.totalorder %s43, 0
    %s46 = sadd.s32 %s45, 1
    %s47 = scalar_select %p44, %s45, %s46
    %p50 = pneg %p44
    %p51 = scmp.eq.s32.totalorder %s9, 3
    %p52 = por %p50, %p51
    %p53 = scmp.ne.s32.totalorder %s45, %s48
    %p54 = scmp.eq.s32.totalorder %s9, 0
    %p55 = por %p53, %p54
    %p56 = scmp.ne.s32.totalorder %s45, %s48
    %p57 = scmp.eq.s32.totalorder %s14, 3
    %p58 = por %p56, %p57
    %p59 = scmp.ne.s32.totalorder %s48, %s49
    %p60 = scmp.eq.s32.totalorder %s14, 0
    %p61 = por %p59, %p60
    %p62 = scmp.ne.s32.totalorder %s48, %s49
    %p63 = scmp.eq.s32.totalorder %s15, 3
    %p64 = por %p62, %p63
    %p66 = scmp.ne.s32.totalorder %s49, %s65
    %p67 = scmp.eq.s32.totalorder %s15, 0
    %p68 = por %p66, %p67
    %s70 = sadd.s32 %s69, 1
    %p73 = scmp.eq.s32.totalorder %s9, 3
    %p74 = scmp.ne.s32.totalorder %s69, %s71
    %p75 = scmp.eq.s32.totalorder %s9, 0
    %p76 = por %p74, %p75
    %p77 = scmp.ne.s32.totalorder %s69, %s71
    %p78 = scmp.eq.s32.totalorder %s14, 3
    %p79 = por %p77, %p78
    %p80 = scmp.ne.s32.totalorder %s71, %s72
    %p81 = scmp.eq.s32.totalorder %s14, 0
    %p82 = por %p80, %p81
    %p83 = scmp.ne.s32.totalorder %s71, %s72
    %p84 = scmp.eq.s32.totalorder %s15, 3
    %p85 = por %p83, %p84
    %p87 = scmp.ne.s32.totalorder %s72, %s86
    %p88 = scmp.eq.s32.totalorder %s15, 0
    %p89 = por %p87, %p88
    %s90 = ssub.s32 %s9, %s16
    %p91 = scmp.eq.s32.totalorder %s90, 0
    %s93 = sadd.s32 %s92, 1
    %s94 = scalar_select %p91, %s92, %s93
    %p97 = pneg %p91
    %p98 = scmp.eq.s32.totalorder %s9, 3
    %p99 = por %p97, %p98
    %p100 = scmp.ne.s32.totalorder %s92, %s95
    %p101 = scmp.eq.s32.totalorder %s9, 0
    %p102 = por %p100, %p101
    %p103 = scmp.ne.s32.totalorder %s92, %s95
    %p104 = scmp.eq.s32.totalorder %s14, 3
    %p105 = por %p103, %p104
    %p106 = scmp.ne.s32.totalorder %s95, %s96
    %p107 = scmp.eq.s32.totalorder %s14, 0
    %p108 = por %p106, %p107
    %p109 = scmp.ne.s32.totalorder %s95, %s96
    %p110 = scmp.eq.s32.totalorder %s15, 3
    %p111 = por %p109, %p110
    %p113 = scmp.ne.s32.totalorder %s96, %s112
    %p114 = scmp.eq.s32.totalorder %s15, 0
    %p115 = por %p113, %p114
    %p116 = scmp.le.s32.totalorder 1, %s9
    %p117 = scmp.lt.s32.totalorder %s9, 5
    %p118 = pnand %p116, %p117
    %p119 = pneg %p118
    // Predicated region
    $region9: #{pillarnet_forward_frames.1} parent=5 // pred_check
      _
    $region10: #{pillarnet_forward_frames.1} parent=5 // pred_check_branch
      %121 = sbr.rel (%p118) target = $region12
    $region11: #{pillarnet_forward_frames.1} parent=5 // pred_region
      %s122 = ssub.s32 %s9, 1
      // Predicated region
      $region13: #{pillarnet_forward_frames.1} parent=11 // pred_check
        %p123 = pneg %p82
      $region14: #{pillarnet_forward_frames.1} parent=11 // pred_check_branch
        %125 = sbr.rel (%p123) target = $region16
      $region15: #{pillarnet_forward_frames.1} parent=11 // pred_region
        _
      $region16: #{pillarnet_forward_frames.1} parent=11 // pred_fallthru
        _
    $region12: #{pillarnet_forward_frames.1} parent=5 // pred_fallthru
      _
    %p126 = scmp.lt.s32.totalorder %s9, 4
    // Predicated region
    $region17: #{pillarnet_forward_frames.1} parent=5 // pred_check
      %p127 = pneg %p126
    $region18: #{pillarnet_forward_frames.1} parent=5 // pred_check_branch
      %129 = sbr.rel (%p127) target = $region20
    $region19: #{pillarnet_forward_frames.1} parent=5 // pred_region
      // Predicated region
      $region21: #{pillarnet_forward_frames.1} parent=19 // pred_check
        %p130 = pneg %p29
      $region22: #{pillarnet_forward_frames.1} parent=19 // pred_check_branch
        %132 = sbr.rel (%p130) target = $region24
      $region23: #{pillarnet_forward_frames.1} parent=19 // pred_region
        %p133 = scmp.lt.s32.totalorder %s9, 3
        %s134 = scalar_select %p133, %s9, 3
        %s135 = smul.addr %s134, 16
        %s136 = smul.addr %s135, 4
        %s137 = scalar_lea.vmem %s0, %s136
      $region24: #{pillarnet_forward_frames.1} parent=19 // pred_fallthru
        _
      // Predicated region
      $region25: #{pillarnet_forward_frames.1} parent=19 // pred_check
        %p138 = pneg %p55
      $region26: #{pillarnet_forward_frames.1} parent=19 // pred_check_branch
        %140 = sbr.rel (%p138) target = $region28
      $region27: #{pillarnet_forward_frames.1} parent=19 // pred_region
        %p141 = scmp.lt.s32.totalorder %s9, 3
        %s142 = scalar_select %p141, %s9, 3
        %s143 = smul.addr %s142, 2
        %s144 = scalar_lea.vmem %s1, %s143
      $region28: #{pillarnet_forward_frames.1} parent=19 // pred_fallthru
        _
    $region20: #{pillarnet_forward_frames.1} parent=5 // pred_fallthru
      _
    %p145 = scmp.le.s32.totalorder 1, %s9
    %p146 = scmp.lt.s32.totalorder %s9, 5
    %p147 = pnand %p145, %p146
    %p148 = pneg %p147
    // Predicated region
    $region29: #{pillarnet_forward_frames.1} parent=5 // pred_check
      _
    $region30: #{pillarnet_forward_frames.1} parent=5 // pred_check_branch
      %150 = sbr.rel (%p147) target = $region32
    $region31: #{pillarnet_forward_frames.1} parent=5 // pred_region
      %s151 = ssub.s32 %s9, 1
      %p152 = scmp.lt.s32.totalorder %s14, 3
      %s153 = scalar_select %p152, %s14, 3
      %s154 = smul.addr %s153, 16
      %s155 = smul.addr %s154, 4
      %s156 = scalar_lea.vmem %s0, %s155
      %p157 = pneg %p35
      %p158 = pneg %p32
      %p159 = scmp.lt.s32.totalorder %s14, 3
      %s160 = scalar_select %p159, %s14, 3
      %s161 = smul.addr %s160, 2
      %s162 = scalar_lea.vmem %s1, %s161
      %p163 = pneg %p61
      %p164 = pneg %p58
      %p165 = pneg %p82
      %p166 = pneg %p79
      %p167 = pneg %p108
      %p168 = pneg %p105
      %p169 = scmp.lt.s32.totalorder %s14, 3
      %s170 = scalar_select %p169, %s14, 3
      %s171 = smul.addr %s170, 2
      %s172 = smul.addr %s171, 8
      %s173 = scalar_lea.vmem %s3, %s172
      %p174 = scmp.lt.s32.totalorder %s14, 3
      %s175 = scalar_select %p174, %s14, 3
      %s176 = smul.addr %s175, 16
      %s177 = smul.addr %s176, 4
      %s178 = scalar_lea.vmem %s0, %s177
      %p179 = scmp.lt.s32.totalorder %s14, 3
      %s180 = scalar_select %p179, %s14, 3
      %s181 = smul.addr %s180, 2
      %s182 = scalar_lea.vmem %s1, %s181
      %p183 = scmp.lt.s32.totalorder %s14, 3
      %s184 = scalar_select %p183, %s14, 3
      %s185 = smul.addr %s184, 2
      %s186 = smul.addr %s185, 8
      %s187 = scalar_lea.vmem %s3, %s186
      %v189 = vld [vmem:[%s2] sm:$0xff]
      %v190 = vpack.c.bf16 %v189, %v189
      %v191 = vld [vmem:[%s182] sm:$0x3]
      %v192 = vld [vmem:[%s178] sm:$0xff]
      %v193 = vld [vmem:[%s178 + $0x8] sm:$0xff]
      %v194 = vld [vmem:[%s178 + $0x10] sm:$0xff]
      %v195 = vld [vmem:[%s178 + $0x18] sm:$0xff]
      %197 = vset.pattern.permute.xlu0 16
      %198 = vperm.xlu0 %197, %v189
      %v199 = vpop.permute.xlu0 %198
      %v205 = vunpack.c.l.b16 %v192
      %v206 = vunpack.c.h.b16 %v192
      %v207 = vunpack.c.l.b16 %v193
      %v208 = vunpack.c.h.b16 %v193
      %v209 = vunpack.c.l.b16 %v194
      %v210 = vunpack.c.h.b16 %v194
      %v211 = vunpack.c.l.b16 %v195
      %v212 = vunpack.c.h.b16 %v195
      %v213 = vpack.c.b16 %v205, %v205
      %v214 = vpack.c.b16 %v206, %v206
      %v215 = vpack.c.b16 %v207, %v207
      %v216 = vpack.c.b16 %v208, %v208
      %v217 = vpack.c.b16 %v209, %v209
      %v218 = vpack.c.b16 %v210, %v210
      %v219 = vpack.c.b16 %v211, %v211
      %v220 = vpack.c.b16 %v212, %v212
      %vm221 = vcmask 64512
      %v223 = vsel %vm221, %v190, 0
      %vm225 = vcmask 1043456
      %v227 = vsel %vm225, %v213, 0
      %v230 = vsel %vm225, %v214, 0
      %v233 = vsel %vm225, %v215, 0
      %v236 = vsel %vm225, %v216, 0
      %v239 = vsel %vm225, %v217, 0
      %v242 = vsel %vm225, %v218, 0
      %v245 = vsel %vm225, %v219, 0
      %v248 = vsel %vm225, %v220, 0
      %250 = vmatpush.bf16.msra.mxu0 0
      %251 = vmatpush.bf16.msra.mxu0 0
      %252 = vmatpush.bf16.msra.mxu0 0
      %253 = vmatpush.bf16.msra.mxu0 0
      %254 = vmatpush.bf16.msra.mxu0 0
      %255 = vmatpush.bf16.msra.mxu0 0
      %256 = vmatpush.bf16.msra.mxu0 0
      %257 = vmatpush.bf16.msra.mxu0 %v227
      %258 = vmatmul.bf16.gmra.mxu0 %v223
      %v259 = vpop.f32.mrf.mxu0
      %v260 = vadd.f32 %v199, %v259
      %v261 = vpop.f32.mrf.mxu0
      %262 = vdwg.mxu0
      %263 = vmatpush.bf16.msra.mxu0 0
      %264 = vmatpush.bf16.msra.mxu0 0
      %265 = vmatpush.bf16.msra.mxu0 0
      %266 = vmatpush.bf16.msra.mxu0 0
      %267 = vmatpush.bf16.msra.mxu0 0
      %268 = vmatpush.bf16.msra.mxu0 0
      %269 = vmatpush.bf16.msra.mxu0 0
      %270 = vmatpush.bf16.msra.mxu0 %v230
      %271 = vmatmul.bf16.gmra.mxu0 %v223
      %v272 = vpop.f32.mrf.mxu0
      %v273 = vadd.f32 %v199, %v272
      %v274 = vpop.f32.mrf.mxu0
      %275 = vdwg.mxu0
      %276 = vmatpush.bf16.msra.mxu0 0
      %277 = vmatpush.bf16.msra.mxu0 0
      %278 = vmatpush.bf16.msra.mxu0 0
      %279 = vmatpush.bf16.msra.mxu0 0
      %280 = vmatpush.bf16.msra.mxu0 0
      %281 = vmatpush.bf16.msra.mxu0 0
      %282 = vmatpush.bf16.msra.mxu0 0
      %283 = vmatpush.bf16.msra.mxu0 %v233
      %284 = vmatmul.bf16.gmra.mxu0 %v223
      %v285 = vpop.f32.mrf.mxu0
      %v286 = vadd.f32 %v199, %v285
      %v287 = vpop.f32.mrf.mxu0
      %288 = vdwg.mxu0
      %289 = vmatpush.bf16.msra.mxu0 0
      %290 = vmatpush.bf16.msra.mxu0 0
      %291 = vmatpush.bf16.msra.mxu0 0
      %292 = vmatpush.bf16.msra.mxu0 0
      %293 = vmatpush.bf16.msra.mxu0 0
      %294 = vmatpush.bf16.msra.mxu0 0
      %295 = vmatpush.bf16.msra.mxu0 0
      %296 = vmatpush.bf16.msra.mxu0 %v236
      %297 = vmatmul.bf16.gmra.mxu0 %v223
      %v298 = vpop.f32.mrf.mxu0
      %v299 = vadd.f32 %v199, %v298
      %v300 = vpop.f32.mrf.mxu0
      %301 = vdwg.mxu0
      %302 = vmatpush.bf16.msra.mxu0 0
      %303 = vmatpush.bf16.msra.mxu0 0
      %304 = vmatpush.bf16.msra.mxu0 0
      %305 = vmatpush.bf16.msra.mxu0 0
      %306 = vmatpush.bf16.msra.mxu0 0
      %307 = vmatpush.bf16.msra.mxu0 0
      %308 = vmatpush.bf16.msra.mxu0 0
      %309 = vmatpush.bf16.msra.mxu0 %v239
      %310 = vmatmul.bf16.gmra.mxu0 %v223
      %v311 = vpop.f32.mrf.mxu0
      %v312 = vadd.f32 %v199, %v311
      %v313 = vpop.f32.mrf.mxu0
      %314 = vdwg.mxu0
      %315 = vmatpush.bf16.msra.mxu0 0
      %316 = vmatpush.bf16.msra.mxu0 0
      %317 = vmatpush.bf16.msra.mxu0 0
      %318 = vmatpush.bf16.msra.mxu0 0
      %319 = vmatpush.bf16.msra.mxu0 0
      %320 = vmatpush.bf16.msra.mxu0 0
      %321 = vmatpush.bf16.msra.mxu0 0
      %322 = vmatpush.bf16.msra.mxu0 %v242
      %323 = vmatmul.bf16.gmra.mxu0 %v223
      %v324 = vpop.f32.mrf.mxu0
      %v325 = vadd.f32 %v199, %v324
      %v326 = vpop.f32.mrf.mxu0
      %327 = vdwg.mxu0
      %328 = vmatpush.bf16.msra.mxu0 0
      %329 = vmatpush.bf16.msra.mxu0 0
      %330 = vmatpush.bf16.msra.mxu0 0
      %331 = vmatpush.bf16.msra.mxu0 0
      %332 = vmatpush.bf16.msra.mxu0 0
      %333 = vmatpush.bf16.msra.mxu0 0
      %334 = vmatpush.bf16.msra.mxu0 0
      %335 = vmatpush.bf16.msra.mxu0 %v245
      %336 = vmatmul.bf16.gmra.mxu0 %v223
      %v337 = vpop.f32.mrf.mxu0
      %v338 = vadd.f32 %v199, %v337
      %v339 = vpop.f32.mrf.mxu0
      %340 = vdwg.mxu0
      %341 = vmatpush.bf16.msra.mxu0 0
      %342 = vmatpush.bf16.msra.mxu0 0
      %343 = vmatpush.bf16.msra.mxu0 0
      %344 = vmatpush.bf16.msra.mxu0 0
      %345 = vmatpush.bf16.msra.mxu0 0
      %346 = vmatpush.bf16.msra.mxu0 0
      %347 = vmatpush.bf16.msra.mxu0 0
      %348 = vmatpush.bf16.msra.mxu0 %v248
      %349 = vmatmul.bf16.gmra.mxu0 %v223
      %v350 = vpop.f32.mrf.mxu0
      %v351 = vadd.f32 %v199, %v350
      %v352 = vpop.f32.mrf.mxu0
      %353 = vdwg.mxu0
      %v354 = vadd.f32 %v260, %v273
      %v355 = vadd.f32 %v354, %v286
      %v356 = vadd.f32 %v355, %v299
      %v357 = vadd.f32 %v356, %v312
      %v358 = vadd.f32 %v357, %v325
      %v359 = vadd.f32 %v358, %v338
      %v360 = vadd.f32 %v359, %v351
      %361 = vadd.xlane.f32.xlu0 %v360
      %v362 = vpop.xlane.xlu0 %361
      %v363 = vadd.f32 %v362, 0.0
      %v364 = vmul.f32 %v260, %v260
      %v365 = vmul.f32 %v273, %v273
      %v366 = vmul.f32 %v286, %v286
      %v367 = vmul.f32 %v299, %v299
      %v368 = vmul.f32 %v312, %v312
      %v369 = vmul.f32 %v325, %v325
      %v370 = vmul.f32 %v338, %v338
      %v371 = vmul.f32 %v351, %v351
      %v372 = vadd.f32 %v364, %v365
      %v373 = vadd.f32 %v372, %v366
      %v374 = vadd.f32 %v373, %v367
      %v375 = vadd.f32 %v374, %v368
      %v376 = vadd.f32 %v375, %v369
      %v377 = vadd.f32 %v376, %v370
      %v378 = vadd.f32 %v377, %v371
      %379 = vadd.xlane.f32.xlu0 %v378
      %v380 = vpop.xlane.xlu0 %379
      %v381 = vadd.f32 %v380, 0.0
      %s382 = scalar_lea.vmem %s178, 32
      %v383 = vld [vmem:[%s382] sm:$0xff]
      %v384 = vld [vmem:[%s382 + $0x8] sm:$0xff]
      %v385 = vld [vmem:[%s382 + $0x10] sm:$0xff]
      %v386 = vld [vmem:[%s382 + $0x18] sm:$0xff]
      %v391 = vunpack.c.l.b16 %v383
      %v392 = vunpack.c.h.b16 %v383
      %v393 = vunpack.c.l.b16 %v384
      %v394 = vunpack.c.h.b16 %v384
      %v395 = vunpack.c.l.b16 %v385
      %v396 = vunpack.c.h.b16 %v385
      %v397 = vunpack.c.l.b16 %v386
      %v398 = vunpack.c.h.b16 %v386
      %v399 = vpack.c.b16 %v391, %v391
      %v400 = vpack.c.b16 %v392, %v392
      %v401 = vpack.c.b16 %v393, %v393
      %v402 = vpack.c.b16 %v394, %v394
      %v403 = vpack.c.b16 %v395, %v395
      %v404 = vpack.c.b16 %v396, %v396
      %v405 = vpack.c.b16 %v397, %v397
      %v406 = vpack.c.b16 %v398, %v398
      %v408 = vsel %vm225, %v399, 0
      %v411 = vsel %vm225, %v400, 0
      %v414 = vsel %vm225, %v401, 0
      %v417 = vsel %vm225, %v402, 0
      %v420 = vsel %vm225, %v403, 0
      %v423 = vsel %vm225, %v404, 0
      %v426 = vsel %vm225, %v405, 0
      %v429 = vsel %vm225, %v406, 0
      %431 = vmatpush.bf16.msra.mxu0 0
      %432 = vmatpush.bf16.msra.mxu0 0
      %433 = vmatpush.bf16.msra.mxu0 0
      %434 = vmatpush.bf16.msra.mxu0 0
      %435 = vmatpush.bf16.msra.mxu0 0
      %436 = vmatpush.bf16.msra.mxu0 0
      %437 = vmatpush.bf16.msra.mxu0 0
      %438 = vmatpush.bf16.msra.mxu0 %v408
      %439 = vmatmul.bf16.gmra.mxu0 %v223
      %v440 = vpop.f32.mrf.mxu0
      %v441 = vadd.f32 %v199, %v440
      %v442 = vpop.f32.mrf.mxu0
      %443 = vdwg.mxu0
      %444 = vmatpush.bf16.msra.mxu0 0
      %445 = vmatpush.bf16.msra.mxu0 0
      %446 = vmatpush.bf16.msra.mxu0 0
      %447 = vmatpush.bf16.msra.mxu0 0
      %448 = vmatpush.bf16.msra.mxu0 0
      %449 = vmatpush.bf16.msra.mxu0 0
      %450 = vmatpush.bf16.msra.mxu0 0
      %451 = vmatpush.bf16.msra.mxu0 %v411
      %452 = vmatmul.bf16.gmra.mxu0 %v223
      %v453 = vpop.f32.mrf.mxu0
      %v454 = vadd.f32 %v199, %v453
      %v455 = vpop.f32.mrf.mxu0
      %456 = vdwg.mxu0
      %457 = vmatpush.bf16.msra.mxu0 0
      %458 = vmatpush.bf16.msra.mxu0 0
      %459 = vmatpush.bf16.msra.mxu0 0
      %460 = vmatpush.bf16.msra.mxu0 0
      %461 = vmatpush.bf16.msra.mxu0 0
      %462 = vmatpush.bf16.msra.mxu0 0
      %463 = vmatpush.bf16.msra.mxu0 0
      %464 = vmatpush.bf16.msra.mxu0 %v414
      %465 = vmatmul.bf16.gmra.mxu0 %v223
      %v466 = vpop.f32.mrf.mxu0
      %v467 = vadd.f32 %v199, %v466
      %v468 = vpop.f32.mrf.mxu0
      %469 = vdwg.mxu0
      %470 = vmatpush.bf16.msra.mxu0 0
      %471 = vmatpush.bf16.msra.mxu0 0
      %472 = vmatpush.bf16.msra.mxu0 0
      %473 = vmatpush.bf16.msra.mxu0 0
      %474 = vmatpush.bf16.msra.mxu0 0
      %475 = vmatpush.bf16.msra.mxu0 0
      %476 = vmatpush.bf16.msra.mxu0 0
      %477 = vmatpush.bf16.msra.mxu0 %v417
      %478 = vmatmul.bf16.gmra.mxu0 %v223
      %v479 = vpop.f32.mrf.mxu0
      %v480 = vadd.f32 %v199, %v479
      %v481 = vpop.f32.mrf.mxu0
      %482 = vdwg.mxu0
      %483 = vmatpush.bf16.msra.mxu0 0
      %484 = vmatpush.bf16.msra.mxu0 0
      %485 = vmatpush.bf16.msra.mxu0 0
      %486 = vmatpush.bf16.msra.mxu0 0
      %487 = vmatpush.bf16.msra.mxu0 0
      %488 = vmatpush.bf16.msra.mxu0 0
      %489 = vmatpush.bf16.msra.mxu0 0
      %490 = vmatpush.bf16.msra.mxu0 %v420
      %491 = vmatmul.bf16.gmra.mxu0 %v223
      %v492 = vpop.f32.mrf.mxu0
      %v493 = vadd.f32 %v199, %v492
      %v494 = vpop.f32.mrf.mxu0
      %495 = vdwg.mxu0
      %496 = vmatpush.bf16.msra.mxu0 0
      %497 = vmatpush.bf16.msra.mxu0 0
      %498 = vmatpush.bf16.msra.mxu0 0
      %499 = vmatpush.bf16.msra.mxu0 0
      %500 = vmatpush.bf16.msra.mxu0 0
      %501 = vmatpush.bf16.msra.mxu0 0
      %502 = vmatpush.bf16.msra.mxu0 0
      %503 = vmatpush.bf16.msra.mxu0 %v423
      %504 = vmatmul.bf16.gmra.mxu0 %v223
      %v505 = vpop.f32.mrf.mxu0
      %v506 = vadd.f32 %v199, %v505
      %v507 = vpop.f32.mrf.mxu0
      %508 = vdwg.mxu0
      %509 = vmatpush.bf16.msra.mxu0 0
      %510 = vmatpush.bf16.msra.mxu0 0
      %511 = vmatpush.bf16.msra.mxu0 0
      %512 = vmatpush.bf16.msra.mxu0 0
      %513 = vmatpush.bf16.msra.mxu0 0
      %514 = vmatpush.bf16.msra.mxu0 0
      %515 = vmatpush.bf16.msra.mxu0 0
      %516 = vmatpush.bf16.msra.mxu0 %v426
      %517 = vmatmul.bf16.gmra.mxu0 %v223
      %v518 = vpop.f32.mrf.mxu0
      %v519 = vadd.f32 %v199, %v518
      %v520 = vpop.f32.mrf.mxu0
      %521 = vdwg.mxu0
      %522 = vmatpush.bf16.msra.mxu0 0
      %523 = vmatpush.bf16.msra.mxu0 0
      %524 = vmatpush.bf16.msra.mxu0 0
      %525 = vmatpush.bf16.msra.mxu0 0
      %526 = vmatpush.bf16.msra.mxu0 0
      %527 = vmatpush.bf16.msra.mxu0 0
      %528 = vmatpush.bf16.msra.mxu0 0
      %529 = vmatpush.bf16.msra.mxu0 %v429
      %530 = vmatmul.bf16.gmra.mxu0 %v223
      %v531 = vpop.f32.mrf.mxu0
      %v532 = vadd.f32 %v199, %v531
      %v533 = vpop.f32.mrf.mxu0
      %534 = vdwg.mxu0
      %v535 = vadd.f32 %v441, %v454
      %v536 = vadd.f32 %v535, %v467
      %v537 = vadd.f32 %v536, %v480
      %v538 = vadd.f32 %v537, %v493
      %v539 = vadd.f32 %v538, %v506
      %v540 = vadd.f32 %v539, %v519
      %v541 = vadd.f32 %v540, %v532
      %542 = vadd.xlane.f32.xlu0 %v541
      %v543 = vpop.xlane.xlu0 %542
      %v544 = vadd.f32 %v363, %v543
      %v545 = vmul.f32 %v441, %v441
      %v546 = vmul.f32 %v454, %v454
      %v547 = vmul.f32 %v467, %v467
      %v548 = vmul.f32 %v480, %v480
      %v549 = vmul.f32 %v493, %v493
      %v550 = vmul.f32 %v506, %v506
      %v551 = vmul.f32 %v519, %v519
      %v552 = vmul.f32 %v532, %v532
      %v553 = vadd.f32 %v545, %v546
      %v554 = vadd.f32 %v553, %v547
      %v555 = vadd.f32 %v554, %v548
      %v556 = vadd.f32 %v555, %v549
      %v557 = vadd.f32 %v556, %v550
      %v558 = vadd.f32 %v557, %v551
      %v559 = vadd.f32 %v558, %v552
      %560 = vadd.xlane.f32.xlu0 %v559
      %v561 = vpop.xlane.xlu0 %560
      %v562 = vadd.f32 %v381, %v561
      %v563 = vrcp.pop 2048.0
      %v564 = vmul.f32 2048.0, %v563
      %v565 = vsub.f32 1.0, %v564
      %v566 = vmul.f32 %v563, %v565
      %v567 = vadd.f32 %v563, %v566
      %vm568 = vweird.f32 %v563
      %v569 = vsel %vm568, %v563, %v567
      %v570 = vmul.f32 %v544, %v569
      %v571 = vmul.f32 %v562, %v569
      %v572 = vmul.f32 %v570, %v570
      %v573 = vsub.f32 %v571, %v572
      %v574 = vmax.f32 %v573, 0.0
      %v575 = vadd.f32 %v574, 0.001
      %v576 = vrsqrt.pop %v575
      %v577 = vmul.f32 %v576, %v575
      %v578 = vmul.f32 %v577, %v576
      %v579 = vmul.f32 0.5, %v578
      %v580 = vsub.f32 1.5, %v579
      %v581 = vmul.f32 %v576, %v580
      %vm582 = vweird.f32 %v575
      %vm583 = vweird.f32 %v576
      %vm584 = vmor %vm582, %vm583
      %v585 = vsel %vm584, %v576, %v581
      %v586 = vmul.f32 %v189, %v585
      %v587 = vmul.f32 %v570, %v586
      %589 = vrot.lane.b32.xlu0 %v587, 1
      %v590 = vpop.permute.xlu0 %589
      %v592 = vsub.f32 %v189, %v590
      %v593 = vlaneseq
      %v594 = vshrl.u32 %v593, 7
      %v595 = vadd.s32 %v594, 8
      %v596 = vadd.s32 %v594, 16
      %v597 = vadd.s32 %v594, 24
      %v598 = vadd.s32 %v594, 32
      %v599 = vadd.s32 %v594, 40
      %v600 = vadd.s32 %v594, 48
      %v601 = vadd.s32 %v594, 56
      %v602 = vadd.s32 %v594, 64
      %v603 = vadd.s32 %v594, 72
      %v604 = vadd.s32 %v594, 80
      %v605 = vadd.s32 %v594, 88
      %v606 = vadd.s32 %v594, 96
      %v607 = vadd.s32 %v594, 104
      %v608 = vadd.s32 %v594, 112
      %v609 = vadd.s32 %v594, 120
      %v610 = vadd.s32 %v594, 128
      %v611 = vadd.s32 %v594, 136
      %v612 = vadd.s32 %v594, 144
      %v613 = vadd.s32 %v594, 152
      %v614 = vadd.s32 %v594, 160
      %v615 = vadd.s32 %v594, 168
      %v616 = vadd.s32 %v594, 176
      %v617 = vadd.s32 %v594, 184
      %v618 = vadd.s32 %v594, 192
      %v619 = vadd.s32 %v594, 200
      %v620 = vadd.s32 %v594, 208
      %v621 = vadd.s32 %v594, 216
      %v622 = vadd.s32 %v594, 224
      %v623 = vadd.s32 %v594, 232
      %v624 = vadd.s32 %v594, 240
      %v625 = vadd.s32 %v594, 248
      %627 = vset.pattern.permute.xlu0 17
      %628 = vperm.xlu0 %627, %v586
      %v629 = vpop.permute.xlu0 %628
      %v631 = vmul.f32 %v260, %v629
      %v632 = vmul.f32 %v273, %v629
      %v633 = vmul.f32 %v286, %v629
      %v634 = vmul.f32 %v299, %v629
      %v635 = vmul.f32 %v312, %v629
      %v636 = vmul.f32 %v325, %v629
      %v637 = vmul.f32 %v338, %v629
      %v638 = vmul.f32 %v351, %v629
      %640 = vset.pattern.permute.xlu0 18
      %641 = vperm.xlu0 %640, %v592
      %v642 = vpop.permute.xlu0 %641
      %v644 = vadd.f32 %v631, %v642
      %v645 = vadd.f32 %v632, %v642
      %v646 = vadd.f32 %v633, %v642
      %v647 = vadd.f32 %v634, %v642
      %v648 = vadd.f32 %v635, %v642
      %v649 = vadd.f32 %v636, %v642
      %v650 = vadd.f32 %v637, %v642
      %v651 = vadd.f32 %v638, %v642
      %v652 = vmax.f32 %v644, 0.0
      %v653 = vmax.f32 %v645, 0.0
      %v654 = vmax.f32 %v646, 0.0
      %v655 = vmax.f32 %v647, 0.0
      %v656 = vmax.f32 %v648, 0.0
      %v657 = vmax.f32 %v649, 0.0
      %v658 = vmax.f32 %v650, 0.0
      %v659 = vmax.f32 %v651, 0.0
      %v660 = vmax.f32 %v652, %v653
      %v661 = vmax.f32 %v660, %v654
      %v662 = vmax.f32 %v661, %v655
      %v663 = vmax.f32 %v662, %v656
      %v664 = vmax.f32 %v663, %v657
      %v665 = vmax.f32 %v664, %v658
      %v666 = vmax.f32 %v665, %v659
      %v667 = vperm.slane %v191, 0
      %vm668 = vcmp.eq.s32.totalorder %v594, %v667
      %vm669 = vcmp.eq.s32.totalorder %v595, %v667
      %vm670 = vcmp.eq.s32.totalorder %v596, %v667
      %vm671 = vcmp.eq.s32.totalorder %v597, %v667
      %vm672 = vcmp.eq.s32.totalorder %v598, %v667
      %vm673 = vcmp.eq.s32.totalorder %v599, %v667
      %vm674 = vcmp.eq.s32.totalorder %v600, %v667
      %vm675 = vcmp.eq.s32.totalorder %v601, %v667
      %vm676 = vcmp.eq.s32.totalorder %v602, %v667
      %vm677 = vcmp.eq.s32.totalorder %v603, %v667
      %vm678 = vcmp.eq.s32.totalorder %v604, %v667
      %vm679 = vcmp.eq.s32.totalorder %v605, %v667
      %vm680 = vcmp.eq.s32.totalorder %v606, %v667
      %vm681 = vcmp.eq.s32.totalorder %v607, %v667
      %vm682 = vcmp.eq.s32.totalorder %v608, %v667
      %vm683 = vcmp.eq.s32.totalorder %v609, %v667
      %vm684 = vcmp.eq.s32.totalorder %v610, %v667
      %vm685 = vcmp.eq.s32.totalorder %v611, %v667
      %vm686 = vcmp.eq.s32.totalorder %v612, %v667
      %vm687 = vcmp.eq.s32.totalorder %v613, %v667
      %vm688 = vcmp.eq.s32.totalorder %v614, %v667
      %vm689 = vcmp.eq.s32.totalorder %v615, %v667
      %vm690 = vcmp.eq.s32.totalorder %v616, %v667
      %vm691 = vcmp.eq.s32.totalorder %v617, %v667
      %vm692 = vcmp.eq.s32.totalorder %v618, %v667
      %vm693 = vcmp.eq.s32.totalorder %v619, %v667
      %vm694 = vcmp.eq.s32.totalorder %v620, %v667
      %vm695 = vcmp.eq.s32.totalorder %v621, %v667
      %vm696 = vcmp.eq.s32.totalorder %v622, %v667
      %vm697 = vcmp.eq.s32.totalorder %v623, %v667
      %vm698 = vcmp.eq.s32.totalorder %v624, %v667
      %vm699 = vcmp.eq.s32.totalorder %v625, %v667
      %v700 = vsel %vm668, 1, 0
      %v701 = vsel %vm669, 1, 0
      %v702 = vsel %vm670, 1, 0
      %v703 = vsel %vm671, 1, 0
      %v704 = vsel %vm672, 1, 0
      %v705 = vsel %vm673, 1, 0
      %v706 = vsel %vm674, 1, 0
      %v707 = vsel %vm675, 1, 0
      %v708 = vsel %vm676, 1, 0
      %v709 = vsel %vm677, 1, 0
      %v710 = vsel %vm678, 1, 0
      %v711 = vsel %vm679, 1, 0
      %v712 = vsel %vm680, 1, 0
      %v713 = vsel %vm681, 1, 0
      %v714 = vsel %vm682, 1, 0
      %v715 = vsel %vm683, 1, 0
      %v716 = vsel %vm684, 1, 0
      %v717 = vsel %vm685, 1, 0
      %v718 = vsel %vm686, 1, 0
      %v719 = vsel %vm687, 1, 0
      %v720 = vsel %vm688, 1, 0
      %v721 = vsel %vm689, 1, 0
      %v722 = vsel %vm690, 1, 0
      %v723 = vsel %vm691, 1, 0
      %v724 = vsel %vm692, 1, 0
      %v725 = vsel %vm693, 1, 0
      %v726 = vsel %vm694, 1, 0
      %v727 = vsel %vm695, 1, 0
      %v728 = vsel %vm696, 1, 0
      %v729 = vsel %vm697, 1, 0
      %v730 = vsel %vm698, 1, 0
      %v731 = vsel %vm699, 1, 0
      %v732 = vcvt.s32.f32 %v700
      %v733 = vcvt.s32.f32 %v701
      %v734 = vcvt.s32.f32 %v702
      %v735 = vcvt.s32.f32 %v703
      %v736 = vcvt.s32.f32 %v704
      %v737 = vcvt.s32.f32 %v705
      %v738 = vcvt.s32.f32 %v706
      %v739 = vcvt.s32.f32 %v707
      %v740 = vcvt.s32.f32 %v708
      %v741 = vcvt.s32.f32 %v709
      %v742 = vcvt.s32.f32 %v710
      %v743 = vcvt.s32.f32 %v711
      %v744 = vcvt.s32.f32 %v712
      %v745 = vcvt.s32.f32 %v713
      %v746 = vcvt.s32.f32 %v714
      %v747 = vcvt.s32.f32 %v715
      %v748 = vcvt.s32.f32 %v716
      %v749 = vcvt.s32.f32 %v717
      %v750 = vcvt.s32.f32 %v718
      %v751 = vcvt.s32.f32 %v719
      %v752 = vcvt.s32.f32 %v720
      %v753 = vcvt.s32.f32 %v721
      %v754 = vcvt.s32.f32 %v722
      %v755 = vcvt.s32.f32 %v723
      %v756 = vcvt.s32.f32 %v724
      %v757 = vcvt.s32.f32 %v725
      %v758 = vcvt.s32.f32 %v726
      %v759 = vcvt.s32.f32 %v727
      %v760 = vcvt.s32.f32 %v728
      %v761 = vcvt.s32.f32 %v729
      %v762 = vcvt.s32.f32 %v730
      %v763 = vcvt.s32.f32 %v731
      %v764 = vpack.c.bf16 %v733, %v732
      %v765 = vpack.c.bf16 %v735, %v734
      %v766 = vpack.c.bf16 %v737, %v736
      %v767 = vpack.c.bf16 %v739, %v738
      %v768 = vpack.c.bf16 %v741, %v740
      %v769 = vpack.c.bf16 %v743, %v742
      %v770 = vpack.c.bf16 %v745, %v744
      %v771 = vpack.c.bf16 %v747, %v746
      %v772 = vpack.c.bf16 %v749, %v748
      %v773 = vpack.c.bf16 %v751, %v750
      %v774 = vpack.c.bf16 %v753, %v752
      %v775 = vpack.c.bf16 %v755, %v754
      %v776 = vpack.c.bf16 %v757, %v756
      %v777 = vpack.c.bf16 %v759, %v758
      %v778 = vpack.c.bf16 %v761, %v760
      %v779 = vpack.c.bf16 %v763, %v762
      %v780 = vpack.c.bf16 %v666, %v666
      %781 = vmatpush.bf16.xpose.msra.mxu0 %v771
      %782 = vmatpush.bf16.xpose.msra.mxu0 %v770
      %783 = vmatpush.bf16.xpose.msra.mxu0 %v769
      %784 = vmatpush.bf16.xpose.msra.mxu0 %v768
      %785 = vmatpush.bf16.xpose.msra.mxu0 %v767
      %786 = vmatpush.bf16.xpose.msra.mxu0 %v766
      %787 = vmatpush.bf16.xpose.msra.mxu0 %v765
      %788 = vmatpush.bf16.xpose.msra.mxu0 %v764
      %789 = vmatmul.bf16.gmra.mxu0 %v780
      %v790 = vpop.f32.mrf.mxu0
      %v791 = vadd.f32 0.0, %v790
      %v792 = vpop.f32.mrf.mxu0
      %793 = vdwg.mxu0
      %794 = vmatpush.bf16.xpose.msra.mxu0 %v779
      %795 = vmatpush.bf16.xpose.msra.mxu0 %v778
      %796 = vmatpush.bf16.xpose.msra.mxu0 %v777
      %797 = vmatpush.bf16.xpose.msra.mxu0 %v776
      %798 = vmatpush.bf16.xpose.msra.mxu0 %v775
      %799 = vmatpush.bf16.xpose.msra.mxu0 %v774
      %800 = vmatpush.bf16.xpose.msra.mxu0 %v773
      %801 = vmatpush.bf16.xpose.msra.mxu0 %v772
      %802 = vmatmul.bf16.gmra.mxu0 %v780
      %v803 = vpop.f32.mrf.mxu0
      %v804 = vadd.f32 0.0, %v803
      %v805 = vpop.f32.mrf.mxu0
      %806 = vdwg.mxu0
      %v807 = vpack.c.bf16 %v791, %v791
      %v808 = vpack.c.bf16 %v804, %v804
      %809 = vset.pattern.permute.xlu0 19
      %810 = vperm.xlu0 %809, %v189
      %v811 = vpop.permute.xlu0 %810
      %814 = vrot.lane.b32.xlu0 %v190, 120
      %v815 = vpop.permute.xlu0 %814
      %v817 = vsel %vm221, %v815, 0
      %v820 = vsel %vm225, %v807, 0
      %v823 = vsel %vm225, %v808, 0
      %825 = vmatpush.bf16.msra.mxu0 0
      %826 = vmatpush.bf16.msra.mxu0 0
      %827 = vmatpush.bf16.msra.mxu0 0
      %828 = vmatpush.bf16.msra.mxu0 0
      %829 = vmatpush.bf16.msra.mxu0 0
      %830 = vmatpush.bf16.msra.mxu0 0
      %831 = vmatpush.bf16.msra.mxu0 0
      %832 = vmatpush.bf16.msra.mxu0 %v820
      %833 = vmatmul.bf16.gmra.mxu0 %v817
      %v834 = vpop.f32.mrf.mxu0
      %v835 = vadd.f32 %v811, %v834
      %v836 = vpop.f32.mrf.mxu0
      %837 = vdwg.mxu0
      %838 = vmatpush.bf16.msra.mxu0 0
      %839 = vmatpush.bf16.msra.mxu0 0
      %840 = vmatpush.bf16.msra.mxu0 0
      %841 = vmatpush.bf16.msra.mxu0 0
      %842 = vmatpush.bf16.msra.mxu0 0
      %843 = vmatpush.bf16.msra.mxu0 0
      %844 = vmatpush.bf16.msra.mxu0 0
      %845 = vmatpush.bf16.msra.mxu0 %v823
      %846 = vmatmul.bf16.gmra.mxu0 %v817
      %v847 = vpop.f32.mrf.mxu0
      %v848 = vadd.f32 %v811, %v847
      %v849 = vpop.f32.mrf.mxu0
      %850 = vdwg.mxu0
      %v851 = vadd.f32 %v835, %v848
      %852 = vadd.xlane.f32.xlu0 %v851
      %v853 = vpop.xlane.xlu0 %852
      %v854 = vadd.f32 %v853, 0.0
      %v855 = vmul.f32 %v835, %v835
      %v856 = vmul.f32 %v848, %v848
      %v857 = vadd.f32 %v855, %v856
      %858 = vadd.xlane.f32.xlu0 %v857
      %v859 = vpop.xlane.xlu0 %858
      %v860 = vadd.f32 %v859, 0.0
      %v861 = vmul.f32 %v441, %v629
      %v862 = vmul.f32 %v454, %v629
      %v863 = vmul.f32 %v467, %v629
      %v864 = vmul.f32 %v480, %v629
      %v865 = vmul.f32 %v493, %v629
      %v866 = vmul.f32 %v506, %v629
      %v867 = vmul.f32 %v519, %v629
      %v868 = vmul.f32 %v532, %v629
      %v869 = vadd.f32 %v861, %v642
      %v870 = vadd.f32 %v862, %v642
      %v871 = vadd.f32 %v863, %v642
      %v872 = vadd.f32 %v864, %v642
      %v873 = vadd.f32 %v865, %v642
      %v874 = vadd.f32 %v866, %v642
      %v875 = vadd.f32 %v867, %v642
      %v876 = vadd.f32 %v868, %v642
      %v877 = vmax.f32 %v869, 0.0
      %v878 = vmax.f32 %v870, 0.0
      %v879 = vmax.f32 %v871, 0.0
      %v880 = vmax.f32 %v872, 0.0
      %v881 = vmax.f32 %v873, 0.0
      %v882 = vmax.f32 %v874, 0.0
      %v883 = vmax.f32 %v875, 0.0
      %v884 = vmax.f32 %v876, 0.0
      %v885 = vmax.f32 %v877, %v878
      %v886 = vmax.f32 %v885, %v879
      %v887 = vmax.f32 %v886, %v880
      %v888 = vmax.f32 %v887, %v881
      %v889 = vmax.f32 %v888, %v882
      %v890 = vmax.f32 %v889, %v883
      %v891 = vmax.f32 %v890, %v884
      %v892 = vperm.slane %v191, 1
      %vm893 = vcmp.eq.s32.totalorder %v594, %v892
      %vm894 = vcmp.eq.s32.totalorder %v595, %v892
      %vm895 = vcmp.eq.s32.totalorder %v596, %v892
      %vm896 = vcmp.eq.s32.totalorder %v597, %v892
      %vm897 = vcmp.eq.s32.totalorder %v598, %v892
      %vm898 = vcmp.eq.s32.totalorder %v599, %v892
      %vm899 = vcmp.eq.s32.totalorder %v600, %v892
      %vm900 = vcmp.eq.s32.totalorder %v601, %v892
      %vm901 = vcmp.eq.s32.totalorder %v602, %v892
      %vm902 = vcmp.eq.s32.totalorder %v603, %v892
      %vm903 = vcmp.eq.s32.totalorder %v604, %v892
      %vm904 = vcmp.eq.s32.totalorder %v605, %v892
      %vm905 = vcmp.eq.s32.totalorder %v606, %v892
      %vm906 = vcmp.eq.s32.totalorder %v607, %v892
      %vm907 = vcmp.eq.s32.totalorder %v608, %v892
      %vm908 = vcmp.eq.s32.totalorder %v609, %v892
      %vm909 = vcmp.eq.s32.totalorder %v610, %v892
      %vm910 = vcmp.eq.s32.totalorder %v611, %v892
      %vm911 = vcmp.eq.s32.totalorder %v612, %v892
      %vm912 = vcmp.eq.s32.totalorder %v613, %v892
      %vm913 = vcmp.eq.s32.totalorder %v614, %v892
      %vm914 = vcmp.eq.s32.totalorder %v615, %v892
      %vm915 = vcmp.eq.s32.totalorder %v616, %v892
      %vm916 = vcmp.eq.s32.totalorder %v617, %v892
      %vm917 = vcmp.eq.s32.totalorder %v618, %v892
      %vm918 = vcmp.eq.s32.totalorder %v619, %v892
      %vm919 = vcmp.eq.s32.totalorder %v620, %v892
      %vm920 = vcmp.eq.s32.totalorder %v621, %v892
      %vm921 = vcmp.eq.s32.totalorder %v622, %v892
      %vm922 = vcmp.eq.s32.totalorder %v623, %v892
      %vm923 = vcmp.eq.s32.totalorder %v624, %v892
      %vm924 = vcmp.eq.s32.totalorder %v625, %v892
      %v925 = vsel %vm893, 1, 0
      %v926 = vsel %vm894, 1, 0
      %v927 = vsel %vm895, 1, 0
      %v928 = vsel %vm896, 1, 0
      %v929 = vsel %vm897, 1, 0
      %v930 = vsel %vm898, 1, 0
      %v931 = vsel %vm899, 1, 0
      %v932 = vsel %vm900, 1, 0
      %v933 = vsel %vm901, 1, 0
      %v934 = vsel %vm902, 1, 0
      %v935 = vsel %vm903, 1, 0
      %v936 = vsel %vm904, 1, 0
      %v937 = vsel %vm905, 1, 0
      %v938 = vsel %vm906, 1, 0
      %v939 = vsel %vm907, 1, 0
      %v940 = vsel %vm908, 1, 0
      %v941 = vsel %vm909, 1, 0
      %v942 = vsel %vm910, 1, 0
      %v943 = vsel %vm911, 1, 0
      %v944 = vsel %vm912, 1, 0
      %v945 = vsel %vm913, 1, 0
      %v946 = vsel %vm914, 1, 0
      %v947 = vsel %vm915, 1, 0
      %v948 = vsel %vm916, 1, 0
      %v949 = vsel %vm917, 1, 0
      %v950 = vsel %vm918, 1, 0
      %v951 = vsel %vm919, 1, 0
      %v952 = vsel %vm920, 1, 0
      %v953 = vsel %vm921, 1, 0
      %v954 = vsel %vm922, 1, 0
      %v955 = vsel %vm923, 1, 0
      %v956 = vsel %vm924, 1, 0
      %v957 = vcvt.s32.f32 %v925
      %v958 = vcvt.s32.f32 %v926
      %v959 = vcvt.s32.f32 %v927
      %v960 = vcvt.s32.f32 %v928
      %v961 = vcvt.s32.f32 %v929
      %v962 = vcvt.s32.f32 %v930
      %v963 = vcvt.s32.f32 %v931
      %v964 = vcvt.s32.f32 %v932
      %v965 = vcvt.s32.f32 %v933
      %v966 = vcvt.s32.f32 %v934
      %v967 = vcvt.s32.f32 %v935
      %v968 = vcvt.s32.f32 %v936
      %v969 = vcvt.s32.f32 %v937
      %v970 = vcvt.s32.f32 %v938
      %v971 = vcvt.s32.f32 %v939
      %v972 = vcvt.s32.f32 %v940
      %v973 = vcvt.s32.f32 %v941
      %v974 = vcvt.s32.f32 %v942
      %v975 = vcvt.s32.f32 %v943
      %v976 = vcvt.s32.f32 %v944
      %v977 = vcvt.s32.f32 %v945
      %v978 = vcvt.s32.f32 %v946
      %v979 = vcvt.s32.f32 %v947
      %v980 = vcvt.s32.f32 %v948
      %v981 = vcvt.s32.f32 %v949
      %v982 = vcvt.s32.f32 %v950
      %v983 = vcvt.s32.f32 %v951
      %v984 = vcvt.s32.f32 %v952
      %v985 = vcvt.s32.f32 %v953
      %v986 = vcvt.s32.f32 %v954
      %v987 = vcvt.s32.f32 %v955
      %v988 = vcvt.s32.f32 %v956
      %v989 = vpack.c.bf16 %v958, %v957
      %v990 = vpack.c.bf16 %v960, %v959
      %v991 = vpack.c.bf16 %v962, %v961
      %v992 = vpack.c.bf16 %v964, %v963
      %v993 = vpack.c.bf16 %v966, %v965
      %v994 = vpack.c.bf16 %v968, %v967
      %v995 = vpack.c.bf16 %v970, %v969
      %v996 = vpack.c.bf16 %v972, %v971
      %v997 = vpack.c.bf16 %v974, %v973
      %v998 = vpack.c.bf16 %v976, %v975
      %v999 = vpack.c.bf16 %v978, %v977
      %v1000 = vpack.c.bf16 %v980, %v979
      %v1001 = vpack.c.bf16 %v982, %v981
      %v1002 = vpack.c.bf16 %v984, %v983
      %v1003 = vpack.c.bf16 %v986, %v985
      %v1004 = vpack.c.bf16 %v988, %v987
      %v1005 = vpack.c.bf16 %v891, %v891
      %1006 = vmatpush.bf16.xpose.msra.mxu0 %v996
      %1007 = vmatpush.bf16.xpose.msra.mxu0 %v995
      %1008 = vmatpush.bf16.xpose.msra.mxu0 %v994
      %1009 = vmatpush.bf16.xpose.msra.mxu0 %v993
      %1010 = vmatpush.bf16.xpose.msra.mxu0 %v992
      %1011 = vmatpush.bf16.xpose.msra.mxu0 %v991
      %1012 = vmatpush.bf16.xpose.msra.mxu0 %v990
      %1013 = vmatpush.bf16.xpose.msra.mxu0 %v989
      %1014 = vmatmul.bf16.gmra.mxu0 %v1005
      %v1015 = vpop.f32.mrf.mxu0
      %v1016 = vadd.f32 0.0, %v1015
      %v1017 = vpop.f32.mrf.mxu0
      %1018 = vdwg.mxu0
      %1019 = vmatpush.bf16.xpose.msra.mxu0 %v1004
      %1020 = vmatpush.bf16.xpose.msra.mxu0 %v1003
      %1021 = vmatpush.bf16.xpose.msra.mxu0 %v1002
      %1022 = vmatpush.bf16.xpose.msra.mxu0 %v1001
      %1023 = vmatpush.bf16.xpose.msra.mxu0 %v1000
      %1024 = vmatpush.bf16.xpose.msra.mxu0 %v999
      %1025 = vmatpush.bf16.xpose.msra.mxu0 %v998
      %1026 = vmatpush.bf16.xpose.msra.mxu0 %v997
      %1027 = vmatmul.bf16.gmra.mxu0 %v1005
      %v1028 = vpop.f32.mrf.mxu0
      %v1029 = vadd.f32 0.0, %v1028
      %v1030 = vpop.f32.mrf.mxu0
      %1031 = vdwg.mxu0
      %v1032 = vpack.c.bf16 %v1016, %v1016
      %v1033 = vpack.c.bf16 %v1029, %v1029
      %v1035 = vsel %vm225, %v1032, 0
      %v1038 = vsel %vm225, %v1033, 0
      %1040 = vmatpush.bf16.msra.mxu0 0
      %1041 = vmatpush.bf16.msra.mxu0 0
      %1042 = vmatpush.bf16.msra.mxu0 0
      %1043 = vmatpush.bf16.msra.mxu0 0
      %1044 = vmatpush.bf16.msra.mxu0 0
      %1045 = vmatpush.bf16.msra.mxu0 0
      %1046 = vmatpush.bf16.msra.mxu0 0
      %1047 = vmatpush.bf16.msra.mxu0 %v1035
      %1048 = vmatmul.bf16.gmra.mxu0 %v817
      %v1049 = vpop.f32.mrf.mxu0
      %v1050 = vadd.f32 %v811, %v1049
      %v1051 = vpop.f32.mrf.mxu0
      %1052 = vdwg.mxu0
      %1053 = vmatpush.bf16.msra.mxu0 0
      %1054 = vmatpush.bf16.msra.mxu0 0
      %1055 = vmatpush.bf16.msra.mxu0 0
      %1056 = vmatpush.bf16.msra.mxu0 0
      %1057 = vmatpush.bf16.msra.mxu0 0
      %1058 = vmatpush.bf16.msra.mxu0 0
      %1059 = vmatpush.bf16.msra.mxu0 0
      %1060 = vmatpush.bf16.msra.mxu0 %v1038
      %1061 = vmatmul.bf16.gmra.mxu0 %v817
      %v1062 = vpop.f32.mrf.mxu0
      %v1063 = vadd.f32 %v811, %v1062
      %v1064 = vpop.f32.mrf.mxu0
      %1065 = vdwg.mxu0
      %v1066 = vadd.f32 %v1050, %v1063
      %1067 = vadd.xlane.f32.xlu0 %v1066
      %v1068 = vpop.xlane.xlu0 %1067
      %v1069 = vadd.f32 %v854, %v1068
      %v1070 = vmul.f32 %v1050, %v1050
      %v1071 = vmul.f32 %v1063, %v1063
      %v1072 = vadd.f32 %v1070, %v1071
      %1073 = vadd.xlane.f32.xlu0 %v1072
      %v1074 = vpop.xlane.xlu0 %1073
      %v1075 = vadd.f32 %v860, %v1074
      %v1076 = vrcp.pop 512.0
      %v1077 = vmul.f32 512.0, %v1076
      %v1078 = vsub.f32 1.0, %v1077
      %v1079 = vmul.f32 %v1076, %v1078
      %v1080 = vadd.f32 %v1076, %v1079
      %vm1081 = vweird.f32 %v1076
      %v1082 = vsel %vm1081, %v1076, %v1080
      %v1083 = vmul.f32 %v1069, %v1082
      %v1084 = vmul.f32 %v1075, %v1082
      %v1085 = vmul.f32 %v1083, %v1083
      %v1086 = vsub.f32 %v1084, %v1085
      %v1087 = vmax.f32 %v1086, 0.0
      %v1088 = vadd.f32 %v1087, 0.001
      %v1089 = vrsqrt.pop %v1088
      %v1090 = vmul.f32 %v1089, %v1088
      %v1091 = vmul.f32 %v1090, %v1089
      %v1092 = vmul.f32 0.5, %v1091
      %v1093 = vsub.f32 1.5, %v1092
      %v1094 = vmul.f32 %v1089, %v1093
      %vm1095 = vweird.f32 %v1088
      %vm1096 = vweird.f32 %v1089
      %vm1097 = vmor %vm1095, %vm1096
      %v1098 = vsel %vm1097, %v1089, %v1094
      %v1099 = vmul.f32 %v189, %v1098
      %v1100 = vmul.f32 %v1083, %v1099
      %1102 = vrot.lane.b32.xlu0 %v1100, 1
      %v1103 = vpop.permute.xlu0 %1102
      %v1105 = vsub.f32 %v189, %v1103
      %v1106 = vlaneseq
      %v1107 = vand.u32 %v1106, 127
      %v1108 = vmul.u32 %v1107, 8
      %vm1109 = vcmp.eq.s32.totalorder %v594, %v1108
      %vm1110 = vcmp.eq.s32.totalorder %v595, %v1108
      %vm1111 = vcmp.eq.s32.totalorder %v596, %v1108
      %vm1112 = vcmp.eq.s32.totalorder %v597, %v1108
      %vm1113 = vcmp.eq.s32.totalorder %v598, %v1108
      %vm1114 = vcmp.eq.s32.totalorder %v599, %v1108
      %vm1115 = vcmp.eq.s32.totalorder %v600, %v1108
      %vm1116 = vcmp.eq.s32.totalorder %v601, %v1108
      %vm1117 = vcmp.eq.s32.totalorder %v602, %v1108
      %vm1118 = vcmp.eq.s32.totalorder %v603, %v1108
      %vm1119 = vcmp.eq.s32.totalorder %v604, %v1108
      %vm1120 = vcmp.eq.s32.totalorder %v605, %v1108
      %vm1121 = vcmp.eq.s32.totalorder %v606, %v1108
      %vm1122 = vcmp.eq.s32.totalorder %v607, %v1108
      %vm1123 = vcmp.eq.s32.totalorder %v608, %v1108
      %vm1124 = vcmp.eq.s32.totalorder %v609, %v1108
      %vm1125 = vcmp.eq.s32.totalorder %v610, %v1108
      %vm1126 = vcmp.eq.s32.totalorder %v611, %v1108
      %vm1127 = vcmp.eq.s32.totalorder %v612, %v1108
      %vm1128 = vcmp.eq.s32.totalorder %v613, %v1108
      %vm1129 = vcmp.eq.s32.totalorder %v614, %v1108
      %vm1130 = vcmp.eq.s32.totalorder %v615, %v1108
      %vm1131 = vcmp.eq.s32.totalorder %v616, %v1108
      %vm1132 = vcmp.eq.s32.totalorder %v617, %v1108
      %vm1133 = vcmp.eq.s32.totalorder %v618, %v1108
      %vm1134 = vcmp.eq.s32.totalorder %v619, %v1108
      %vm1135 = vcmp.eq.s32.totalorder %v620, %v1108
      %vm1136 = vcmp.eq.s32.totalorder %v621, %v1108
      %vm1137 = vcmp.eq.s32.totalorder %v622, %v1108
      %vm1138 = vcmp.eq.s32.totalorder %v623, %v1108
      %vm1139 = vcmp.eq.s32.totalorder %v624, %v1108
      %vm1140 = vcmp.eq.s32.totalorder %v625, %v1108
      %v1141 = vsel %vm1109, 1, 0
      %v1142 = vsel %vm1110, 1, 0
      %v1143 = vsel %vm1111, 1, 0
      %v1144 = vsel %vm1112, 1, 0
      %v1145 = vsel %vm1113, 1, 0
      %v1146 = vsel %vm1114, 1, 0
      %v1147 = vsel %vm1115, 1, 0
      %v1148 = vsel %vm1116, 1, 0
      %v1149 = vsel %vm1117, 1, 0
      %v1150 = vsel %vm1118, 1, 0
      %v1151 = vsel %vm1119, 1, 0
      %v1152 = vsel %vm1120, 1, 0
      %v1153 = vsel %vm1121, 1, 0
      %v1154 = vsel %vm1122, 1, 0
      %v1155 = vsel %vm1123, 1, 0
      %v1156 = vsel %vm1124, 1, 0
      %v1157 = vsel %vm1125, 1, 0
      %v1158 = vsel %vm1126, 1, 0
      %v1159 = vsel %vm1127, 1, 0
      %v1160 = vsel %vm1128, 1, 0
      %v1161 = vsel %vm1129, 1, 0
      %v1162 = vsel %vm1130, 1, 0
      %v1163 = vsel %vm1131, 1, 0
      %v1164 = vsel %vm1132, 1, 0
      %v1165 = vsel %vm1133, 1, 0
      %v1166 = vsel %vm1134, 1, 0
      %v1167 = vsel %vm1135, 1, 0
      %v1168 = vsel %vm1136, 1, 0
      %v1169 = vsel %vm1137, 1, 0
      %v1170 = vsel %vm1138, 1, 0
      %v1171 = vsel %vm1139, 1, 0
      %v1172 = vsel %vm1140, 1, 0
      %v1173 = vcvt.s32.f32 %v1141
      %v1174 = vcvt.s32.f32 %v1142
      %v1175 = vcvt.s32.f32 %v1143
      %v1176 = vcvt.s32.f32 %v1144
      %v1177 = vcvt.s32.f32 %v1145
      %v1178 = vcvt.s32.f32 %v1146
      %v1179 = vcvt.s32.f32 %v1147
      %v1180 = vcvt.s32.f32 %v1148
      %v1181 = vcvt.s32.f32 %v1149
      %v1182 = vcvt.s32.f32 %v1150
      %v1183 = vcvt.s32.f32 %v1151
      %v1184 = vcvt.s32.f32 %v1152
      %v1185 = vcvt.s32.f32 %v1153
      %v1186 = vcvt.s32.f32 %v1154
      %v1187 = vcvt.s32.f32 %v1155
      %v1188 = vcvt.s32.f32 %v1156
      %v1189 = vcvt.s32.f32 %v1157
      %v1190 = vcvt.s32.f32 %v1158
      %v1191 = vcvt.s32.f32 %v1159
      %v1192 = vcvt.s32.f32 %v1160
      %v1193 = vcvt.s32.f32 %v1161
      %v1194 = vcvt.s32.f32 %v1162
      %v1195 = vcvt.s32.f32 %v1163
      %v1196 = vcvt.s32.f32 %v1164
      %v1197 = vcvt.s32.f32 %v1165
      %v1198 = vcvt.s32.f32 %v1166
      %v1199 = vcvt.s32.f32 %v1167
      %v1200 = vcvt.s32.f32 %v1168
      %v1201 = vcvt.s32.f32 %v1169
      %v1202 = vcvt.s32.f32 %v1170
      %v1203 = vcvt.s32.f32 %v1171
      %v1204 = vcvt.s32.f32 %v1172
      %v1205 = vpack.c.bf16 %v1174, %v1173
      %v1206 = vpack.c.bf16 %v1176, %v1175
      %v1207 = vpack.c.bf16 %v1178, %v1177
      %v1208 = vpack.c.bf16 %v1180, %v1179
      %v1209 = vpack.c.bf16 %v1182, %v1181
      %v1210 = vpack.c.bf16 %v1184, %v1183
      %v1211 = vpack.c.bf16 %v1186, %v1185
      %v1212 = vpack.c.bf16 %v1188, %v1187
      %v1213 = vpack.c.bf16 %v1190, %v1189
      %v1214 = vpack.c.bf16 %v1192, %v1191
      %v1215 = vpack.c.bf16 %v1194, %v1193
      %v1216 = vpack.c.bf16 %v1196, %v1195
      %v1217 = vpack.c.bf16 %v1198, %v1197
      %v1218 = vpack.c.bf16 %v1200, %v1199
      %v1219 = vpack.c.bf16 %v1202, %v1201
      %v1220 = vpack.c.bf16 %v1204, %v1203
      %1222 = vset.pattern.permute.xlu0 20
      %1223 = vperm.xlu0 %1222, %v1099
      %v1224 = vpop.permute.xlu0 %1223
      %v1226 = vmul.f32 %v835, %v1224
      %v1227 = vmul.f32 %v848, %v1224
      %1229 = vset.pattern.permute.xlu0 21
      %1230 = vperm.xlu0 %1229, %v1105
      %v1231 = vpop.permute.xlu0 %1230
      %v1233 = vadd.f32 %v1226, %v1231
      %v1234 = vadd.f32 %v1227, %v1231
      %v1235 = vmax.f32 %v1233, 0.0
      %v1236 = vmax.f32 %v1234, 0.0
      %1237 = vrot.lane.b32.xlu0 %v1235, 127
      %v1238 = vpop.permute.xlu0 %1237
      %1239 = vrot.lane.b32.xlu0 %v1236, 127
      %v1240 = vpop.permute.xlu0 %1239
      %vm1241 = vcmp.lt.s32.totalorder %v1107, 127
      %v1242 = vsel %vm1241, %v1238, %v1240
      %v1243 = vsel %vm1241, %v1240, %v1238
      %v1244 = vmax.f32 %v1235, %v1242
      %v1245 = vmax.f32 %v1236, %v1243
      %1246 = vrot.lane.b32.xlu0 %v1244, 126
      %v1247 = vpop.permute.xlu0 %1246
      %1248 = vrot.lane.b32.xlu0 %v1245, 126
      %v1249 = vpop.permute.xlu0 %1248
      %vm1250 = vcmp.lt.s32.totalorder %v1107, 126
      %v1251 = vsel %vm1250, %v1247, %v1249
      %v1252 = vsel %vm1250, %v1249, %v1247
      %v1253 = vmax.f32 %v1244, %v1251
      %v1254 = vmax.f32 %v1245, %v1252
      %1255 = vrot.lane.b32.xlu0 %v1253, 124
      %v1256 = vpop.permute.xlu0 %1255
      %1257 = vrot.lane.b32.xlu0 %v1254, 124
      %v1258 = vpop.permute.xlu0 %1257
      %vm1259 = vcmp.lt.s32.totalorder %v1107, 124
      %v1260 = vsel %vm1259, %v1256, %v1258
      %v1261 = vsel %vm1259, %v1258, %v1256
      %v1262 = vmax.f32 %v1253, %v1260
      %v1263 = vmax.f32 %v1254, %v1261
      %v1264 = vpack.c.bf16 %v1262, %v1262
      %v1265 = vpack.c.bf16 %v1263, %v1263
      %1266 = vmatpush.bf16.msra.mxu0 %v1212
      %1267 = vmatpush.bf16.msra.mxu0 %v1211
      %1268 = vmatpush.bf16.msra.mxu0 %v1210
      %1269 = vmatpush.bf16.msra.mxu0 %v1209
      %1270 = vmatpush.bf16.msra.mxu0 %v1208
      %1271 = vmatpush.bf16.msra.mxu0 %v1207
      %1272 = vmatpush.bf16.msra.mxu0 %v1206
      %1273 = vmatpush.bf16.msra.mxu0 %v1205
      %1274 = vmatmul.bf16.gmra.mxu0 %v1264
      %v1275 = vpop.f32.mrf.mxu0
      %v1276 = vadd.f32 0.0, %v1275
      %v1277 = vpop.f32.mrf.mxu0
      %1278 = vdwg.mxu0
      %1279 = vmatpush.bf16.msra.mxu0 %v1220
      %1280 = vmatpush.bf16.msra.mxu0 %v1219
      %1281 = vmatpush.bf16.msra.mxu0 %v1218
      %1282 = vmatpush.bf16.msra.mxu0 %v1217
      %1283 = vmatpush.bf16.msra.mxu0 %v1216
      %1284 = vmatpush.bf16.msra.mxu0 %v1215
      %1285 = vmatpush.bf16.msra.mxu0 %v1214
      %1286 = vmatpush.bf16.msra.mxu0 %v1213
      %1287 = vmatmul.bf16.gmra.mxu0 %v1265
      %v1288 = vpop.f32.mrf.mxu0
      %v1289 = vadd.f32 %v1276, %v1288
      %v1290 = vpop.f32.mrf.mxu0
      %1291 = vdwg.mxu0
      %vm1292 = vcmask 261120
      %1293 = vst.msk [vmem:[%s187] sm:$0xff] %vm1292, %v1289
      %v1294 = vmul.f32 %v1050, %v1224
      %v1295 = vmul.f32 %v1063, %v1224
      %v1296 = vadd.f32 %v1294, %v1231
      %v1297 = vadd.f32 %v1295, %v1231
      %v1298 = vmax.f32 %v1296, 0.0
      %v1299 = vmax.f32 %v1297, 0.0
      %1300 = vrot.lane.b32.xlu0 %v1298, 127
      %v1301 = vpop.permute.xlu0 %1300
      %1302 = vrot.lane.b32.xlu0 %v1299, 127
      %v1303 = vpop.permute.xlu0 %1302
      %v1304 = vsel %vm1241, %v1301, %v1303
      %v1305 = vsel %vm1241, %v1303, %v1301
      %v1306 = vmax.f32 %v1298, %v1304
      %v1307 = vmax.f32 %v1299, %v1305
      %1308 = vrot.lane.b32.xlu0 %v1306, 126
      %v1309 = vpop.permute.xlu0 %1308
      %1310 = vrot.lane.b32.xlu0 %v1307, 126
      %v1311 = vpop.permute.xlu0 %1310
      %v1312 = vsel %vm1250, %v1309, %v1311
      %v1313 = vsel %vm1250, %v1311, %v1309
      %v1314 = vmax.f32 %v1306, %v1312
      %v1315 = vmax.f32 %v1307, %v1313
      %1316 = vrot.lane.b32.xlu0 %v1314, 124
      %v1317 = vpop.permute.xlu0 %1316
      %1318 = vrot.lane.b32.xlu0 %v1315, 124
      %v1319 = vpop.permute.xlu0 %1318
      %v1320 = vsel %vm1259, %v1317, %v1319
      %v1321 = vsel %vm1259, %v1319, %v1317
      %v1322 = vmax.f32 %v1314, %v1320
      %v1323 = vmax.f32 %v1315, %v1321
      %v1324 = vpack.c.bf16 %v1322, %v1322
      %v1325 = vpack.c.bf16 %v1323, %v1323
      %1326 = vmatpush.bf16.msra.mxu0 %v1212
      %1327 = vmatpush.bf16.msra.mxu0 %v1211
      %1328 = vmatpush.bf16.msra.mxu0 %v1210
      %1329 = vmatpush.bf16.msra.mxu0 %v1209
      %1330 = vmatpush.bf16.msra.mxu0 %v1208
      %1331 = vmatpush.bf16.msra.mxu0 %v1207
      %1332 = vmatpush.bf16.msra.mxu0 %v1206
      %1333 = vmatpush.bf16.msra.mxu0 %v1205
      %1334 = vmatmul.bf16.gmra.mxu0 %v1324
      %v1335 = vpop.f32.mrf.mxu0
      %v1336 = vadd.f32 0.0, %v1335
      %v1337 = vpop.f32.mrf.mxu0
      %1338 = vdwg.mxu0
      %1339 = vmatpush.bf16.msra.mxu0 %v1220
      %1340 = vmatpush.bf16.msra.mxu0 %v1219
      %1341 = vmatpush.bf16.msra.mxu0 %v1218
      %1342 = vmatpush.bf16.msra.mxu0 %v1217
      %1343 = vmatpush.bf16.msra.mxu0 %v1216
      %1344 = vmatpush.bf16.msra.mxu0 %v1215
      %1345 = vmatpush.bf16.msra.mxu0 %v1214
      %1346 = vmatpush.bf16.msra.mxu0 %v1213
      %1347 = vmatmul.bf16.gmra.mxu0 %v1325
      %v1348 = vpop.f32.mrf.mxu0
      %v1349 = vadd.f32 %v1336, %v1348
      %v1350 = vpop.f32.mrf.mxu0
      %1351 = vdwg.mxu0
      %s1352 = scalar_lea.vmem %s187, 8
      %1353 = vst.msk [vmem:[%s1352] sm:$0xff] %vm1292, %v1349
      %p1354 = scmp.lt.s32.totalorder %s14, 3
      %s1355 = scalar_select %p1354, %s14, 3
      %s1356 = smul.addr %s1355, 2
      %s1357 = smul.addr %s1356, 8
      %s1358 = scalar_lea.vmem %s3, %s1357
      // Predicated region
      $region33: #{pillarnet_forward_frames.1} parent=31 // pred_check
        %p1359 = pneg %p105
      $region34: #{pillarnet_forward_frames.1} parent=31 // pred_check_branch
        %1361 = sbr.rel (%p1359) target = $region36
      $region35: #{pillarnet_forward_frames.1} parent=31 // pred_region
        _
      $region36: #{pillarnet_forward_frames.1} parent=31 // pred_fallthru
        _
    $region32: #{pillarnet_forward_frames.1} parent=5 // pred_fallthru
      _
    %p1362 = scmp.le.s32.totalorder 2, %s9
    // Predicated region
    $region37: #{pillarnet_forward_frames.1} parent=5 // pred_check
      %p1363 = pneg %p1362
    $region38: #{pillarnet_forward_frames.1} parent=5 // pred_check_branch
      %1365 = sbr.rel (%p1363) target = $region40
    $region39: #{pillarnet_forward_frames.1} parent=5 // pred_region
      %s1366 = ssub.s32 %s9, 2
      // Predicated region
      $region41: #{pillarnet_forward_frames.1} parent=39 // pred_check
        %p1367 = pneg %p111
      $region42: #{pillarnet_forward_frames.1} parent=39 // pred_check_branch
        %1369 = sbr.rel (%p1367) target = $region44
      $region43: #{pillarnet_forward_frames.1} parent=39 // pred_region
        %p1370 = scmp.lt.s32.totalorder %s15, 3
        %s1371 = scalar_select %p1370, %s15, 3
        %s1372 = smul.addr %s1371, 2
        %s1373 = smul.addr %s1372, 8
        %s1374 = scalar_lea.vmem %s3, %s1373
      $region44: #{pillarnet_forward_frames.1} parent=39 // pred_fallthru
        _
    $region40: #{pillarnet_forward_frames.1} parent=5 // pred_fallthru
      _
  $region6: #{pillarnet_forward_frames.1} parent=0 // loop_footer
    %s13 = sadd.s32 1, %s9
  $region7: #{pillarnet_forward_frames.1} parent=0 // loop_footer_branch
    %8 = sbr.rel target = $region3
  $region8: #{pillarnet_forward_frames.1} parent=0 // loop_exit
    _

</llo_original>
